<compile_context>
chip_gen: v5e
topology: v5e:2x2
jax: 0.10.0
libtpu: 0.0.40
codegen_flags: <defaults>
</compile_context>

<pallas_src>
import functools

import jax
import jax.numpy as jnp
from jax.experimental import pallas as pl
from jax.experimental.pallas import tpu as pltpu


# ----------------------------------------------------------------------------
# Fused Pallas kernel: all conv(+BN)+ReLU layers + residual, one image / step
# ----------------------------------------------------------------------------
def dncnn_fused_kernel(x_ref, mask_ref, w_ref, s_ref, o_ref, act_ref, *,
                       C, F, L, W_row, LEN, WIN0, compute_dtype):
    # x_ref   : (1, C, LEN)   image in flattened row-padded layout, f32
    # mask_ref: (1, LEN)      1.0 on interior pixels, 0.0 on row-pad columns
    # w_ref   : (L, F, 9*F)   packed weights [l, cout, tap*F + cin], BN folded
    # s_ref   : (L, F, 1)     folded per-output-channel shift (bias/BN), f32
    # o_ref   : (1, C, LEN)   residual output x - dncnn(x), window layout
    # act_ref : (F, SB)       activation buffer, SB = WIN0 + LEN + W_row + 1
    SB = act_ref.shape[1]
    cd = compute_dtype

    # Per-step init: zero only the halo strips that taps can read but no layer
    # ever writes, plus the unused input channels [C, F) of the window (layer 0
    # contracts all F channels against zero-padded weights, so they must not be
    # stale/NaN).  Everything else in the window is overwritten before use.
    act_ref[:, pl.ds(0, WIN0)] = jnp.zeros((F, WIN0), cd)
    act_ref[:, pl.ds(WIN0 + LEN, SB - WIN0 - LEN)] = jnp.zeros(
        (F, SB - WIN0 - LEN), cd)
    act_ref[pl.ds(C, F - C), pl.ds(WIN0, LEN)] = jnp.zeros((F - C, LEN), cd)

    x_win = x_ref[0]                                        # (C, LEN) f32
    act_ref[pl.ds(0, C), pl.ds(WIN0, LEN)] = x_win.astype(cd)

    mask = mask_ref[...]                                    # (1, LEN) f32

    def conv9(layer):
        # 3x3 conv as 9 accumulated MXU dots: acc += W_tap(F,F) @ taps(F,LEN).
        wl = w_ref[layer]                                   # (F, 9F)
        acc = None
        for t in range(9):
            ky, kx = divmod(t, 3)
            start = WIN0 + (ky - 1) * W_row + (kx - 1)
            p = act_ref[:, pl.ds(start, LEN)]               # (F, LEN)
            d = jnp.dot(wl[:, t * F:(t + 1) * F], p,
                        preferred_element_type=jnp.float32)
            acc = d if acc is None else acc + d
        return acc                                          # (F, LEN) f32

    # Layers 0 .. L-2: conv (+ folded BN) + ReLU.  Rolled over layers so the
    # body stays compact at realistic depths (num_of_layers = 17/20).
    def relu_layer(layer, carry):
        h = jnp.maximum(conv9(layer) + s_ref[layer], 0.0) * mask  # f32 epilogue
        act_ref[:, pl.ds(WIN0, LEN)] = h.astype(cd)         # lane-dense store
        return carry

    jax.lax.fori_loop(0, L - 1, relu_layer, 0)

    # Last layer (conv + bias, no ReLU) fused with the residual out = x - y.
    y = conv9(L - 1) + s_ref[L - 1]                         # (F, LEN) f32
    o_ref[0] = (x_win - y[0:C]).astype(o_ref.dtype)


# ----------------------------------------------------------------------------
# Wrapper: NCHW in/out, one pallas_call for the whole network
# ----------------------------------------------------------------------------
def dncnn_forward_pallas(x_nchw, params):
    """x_nchw: (N, C, H, W) float32.  params: dict from pack_dncnn_params."""
    N, C, H, W = x_nchw.shape
    w, s = params["w"], params["shift"]
    L, F, _ = w.shape
    compute_dtype = w.dtype

    W_row = W + 2                 # one zero column on each side of every row
    LEN = H * W_row               # compute-window length (lane axis)
    WIN0 = W_row + 1              # window start inside the activation buffer
    SB = WIN0 + LEN + W_row + 1   # buffer length (window + halos)

    # Flattened row-padded window layout (lane-dense kernel I/O).
    x_win = jnp.pad(x_nchw, ((0, 0), (0, 0), (0, 0), (1, 1))).reshape(N, C, LEN)
    mask = jnp.pad(jnp.ones((H, W), jnp.float32), ((0, 0), (1, 1))).reshape(1, LEN)

    kern = functools.partial(dncnn_fused_kernel, C=C, F=F, L=L, W_row=W_row,
                             LEN=LEN, WIN0=WIN0, compute_dtype=compute_dtype)
    out_win = pl.pallas_call(
        kern,
        out_shape=jax.ShapeDtypeStruct((N, C, LEN), x_nchw.dtype),
        grid_spec=pltpu.PrefetchScalarGridSpec(
            num_scalar_prefetch=0,
            grid=(N,),                                      # one image per step
            in_specs=[
                pl.BlockSpec((1, C, LEN), lambda n: (n, 0, 0)),   # image window
                pl.BlockSpec((1, LEN), lambda n: (0, 0)),         # interior mask
                pl.BlockSpec((L, F, 9 * F), lambda n: (0, 0, 0)), # weights
                pl.BlockSpec((L, F, 1), lambda n: (0, 0, 0)),     # shifts
            ],
            out_specs=pl.BlockSpec((1, C, LEN), lambda n: (n, 0, 0)),
            scratch_shapes=[pltpu.VMEM((F, SB), compute_dtype)],
        ),
        compiler_params=pltpu.CompilerParams(
            dimension_semantics=("parallel",),              # megacore / 2 TCs
        ),
    )(x_win, mask, w, s)

    # Unpack the window layout back to NCHW (drops the row-pad columns).
    return out_win.reshape(N, C, H, W_row)[:, :, :, 1:W + 1]


# ----------------------------------------------------------------------------
# Parameter construction (mirrors DnCNN.__init__) and packing
# ----------------------------------------------------------------------------
def init_dncnn_params(key, channels, num_of_layers, features):
    """Per-layer parameters; BatchNorm folded in eval mode (running stats)."""
    eps = 1e-4  # nn.BatchNorm2d eps in the module
    layers = []

    def conv_init(k, cin, cout):
        kw, kb = jax.random.split(k)
        w = jax.random.normal(kw, (3, 3, cin, cout), jnp.float32) * 0.05
        b = jax.random.normal(kb, (cout,), jnp.float32) * 0.01
        return w, b

    keys = jax.random.split(key, num_of_layers)

    # first layer: conv(channels -> features) + ReLU
    w, b = conv_init(keys[0], channels, features)
    layers.append(dict(w=w, scale=jnp.ones((features,), jnp.float32),
                       shift=b, relu=True))

    # middle layers: conv(features -> features) + BN(eval, folded) + ReLU
    for i in range(num_of_layers - 2):
        w, b = conv_init(keys[1 + i], features, features)
        gamma = jnp.ones((features,), jnp.float32)      # PyTorch default init
        beta = jnp.zeros((features,), jnp.float32)
        running_mean = jnp.zeros((features,), jnp.float32)
        running_var = jnp.ones((features,), jnp.float32)
        scale = gamma / jnp.sqrt(running_var + eps)
        shift = (b - running_mean) * scale + beta
        layers.append(dict(w=w, scale=scale, shift=shift, relu=True))

    # last layer: conv(features -> channels), no activation
    w, b = conv_init(keys[-1], features, channels)
    layers.append(dict(w=w, scale=jnp.ones((channels,), jnp.float32),
                       shift=b, relu=False))
    return layers


def pack_dncnn_params(layers, features, compute_dtype=jnp.bfloat16):
    """Pack per-layer params into the fused kernel's layout.

    Weights become (L, F, 9*F), indexed [l, cout, tap*F + cin], with the BN
    scale folded into the weights; the first layer's Cin and the last layer's
    Cout are zero-padded to F so the in-kernel layer loop is uniform.
    Shifts (bias / folded BN) stay float32 as (L, F, 1).
    """
    F = features
    ws, shifts = [], []
    for lyr in layers:
        w = lyr["w"]                                    # (3, 3, cin, cout) HWIO
        cin, cout = w.shape[2], w.shape[3]
        w = w * lyr["scale"][None, None, None, :]       # fold BN scale
        w = jnp.transpose(w.reshape(9, cin, cout), (2, 0, 1))   # (cout, 9, cin)
        w = jnp.pad(w, ((0, F - cout), (0, 0), (0, F - cin)))   # zero-pad
        ws.append(w.reshape(F, 9 * F))
        shifts.append(jnp.pad(lyr["shift"], (0, F - cout)))
    return dict(w=jnp.stack(ws).astype(compute_dtype),              # (L, F, 9F)
                shift=jnp.stack(shifts)[:, :, None].astype(jnp.float32))  # (L,F,1)


# ----------------------------------------------------------------------------
# Plain-JAX reference (correctness check only)
# ----------------------------------------------------------------------------
def dncnn_forward_reference(x_nchw, layers):
    x = jnp.transpose(x_nchw, (0, 2, 3, 1))
    y = x
    for lyr in layers:
        y = jax.lax.conv_general_dilated(
            y, lyr["w"], window_strides=(1, 1), padding="SAME",
            dimension_numbers=("NHWC", "HWIO", "NHWC"))
        y = y * lyr["scale"] + lyr["shift"]
        if lyr["relu"]:
            y = jnp.maximum(y, 0.0)
    out = x - y                                          # residual = True
    return jnp.transpose(out, (0, 3, 1, 2))


# ----------------------------------------------------------------------------
if __name__ == "__main__":
    # DnCNN(channels=4, num_of_layers=6, features=32) on a 2 x 4 x 16 x 16 batch.
    N, C, H, W = 2, 4, 16, 16
    num_of_layers, features = 6, 32

    key = jax.random.PRNGKey(0)
    k_x, k_p = jax.random.split(key)
    x = jax.random.normal(k_x, (N, C, H, W), jnp.float32)

    layers = init_dncnn_params(k_p, C, num_of_layers, features)
    ref = dncnn_forward_reference(x, layers)

    fwd = jax.jit(dncnn_forward_pallas)

    # f32 operands: tight check against the f32 reference.
    out_f32 = jax.block_until_ready(
        fwd(x, pack_dncnn_params(layers, features, jnp.float32)))
    assert out_f32.shape == (N, C, H, W)
    err_f32 = float(jnp.max(jnp.abs(out_f32 - ref)))
    assert err_f32 < 2e-3, f"f32 max abs err {err_f32}"

    # bf16 operands (default / recommended on v6e-v7x): looser tolerance since
    # activations round-trip through the bf16 VMEM buffer every layer.
    out_bf16 = jax.block_until_ready(
        fwd(x, pack_dncnn_params(layers, features, jnp.bfloat16)))
    err_bf16 = float(jnp.max(jnp.abs(out_bf16 - ref)))
    assert err_bf16 < 5e-2, f"bf16 max abs err {err_bf16}"

    print("KERNEL_OK")
</pallas_src>

<mosaic_0001>
module attributes {stable_mosaic.version = 11 : i64} {
  func.func @dncnn_fused_kernel(%arg0: i32, %arg1: memref<1x4x288xf32, #tpu.memory_space<vmem>>, %arg2: memref<1x288xf32, #tpu.memory_space<vmem>>, %arg3: memref<6x32x288xf32, #tpu.memory_space<vmem>>, %arg4: memref<6x32x1xf32, #tpu.memory_space<vmem>>, %arg5: memref<1x4x288xf32, #tpu.memory_space<vmem>>, %arg6: memref<32x326xf32, #tpu.memory_space<vmem>>) attributes {dimension_semantics = [#tpu.dimension_semantics<parallel>], iteration_bounds = array<i64: 2>, scalar_prefetch = 0 : i64, scratch_operands = 1 : i64, tpu.core_type = #tpu.core_type<tc>, window_params = [{transform_indices = @transform_0, window_bounds = array<i64: 1, 4, 288>}, {pipeline_mode = #tpu.pipeline_mode<synchronous>, transform_indices = @transform_1, window_bounds = array<i64: 1, 288>}, {pipeline_mode = #tpu.pipeline_mode<synchronous>, transform_indices = @transform_2, window_bounds = array<i64: 6, 32, 288>}, {pipeline_mode = #tpu.pipeline_mode<synchronous>, transform_indices = @transform_3, window_bounds = array<i64: 6, 32, 1>}, {transform_indices = @transform_4, window_bounds = array<i64: 1, 4, 288>}]} {
    %cst = arith.constant 0.000000e+00 : f32
    %0 = vector.broadcast %cst : f32 to vector<32x19xf32>
    %c0 = arith.constant 0 : index
    %c0_0 = arith.constant 0 : index
    %1 = vector.load %arg6[%c0, %c0_0] : memref<32x326xf32, #tpu.memory_space<vmem>>, vector<32x19xf32>
    tpu.vector_store %arg6[%c0, %c0_0], %0 {strides = array<i32>} : memref<32x326xf32, #tpu.memory_space<vmem>>, vector<32x19xf32>,
    %cst_1 = arith.constant 0.000000e+00 : f32
    %2 = vector.broadcast %cst_1 : f32 to vector<32x19xf32>
    %c0_2 = arith.constant 0 : index
    %c307 = arith.constant 307 : index
    %3 = vector.load %arg6[%c0_2, %c307] : memref<32x326xf32, #tpu.memory_space<vmem>>, vector<32x19xf32>
    tpu.vector_store %arg6[%c0_2, %c307], %2 {strides = array<i32>} : memref<32x326xf32, #tpu.memory_space<vmem>>, vector<32x19xf32>,
    %cst_3 = arith.constant 0.000000e+00 : f32
    %4 = vector.broadcast %cst_3 : f32 to vector<28x288xf32>
    %c4 = arith.constant 4 : index
    %c19 = arith.constant 19 : index
    %5 = vector.load %arg6[%c4, %c19] : memref<32x326xf32, #tpu.memory_space<vmem>>, vector<28x288xf32>
    tpu.vector_store %arg6[%c4, %c19], %4 {strides = array<i32>} : memref<32x326xf32, #tpu.memory_space<vmem>>, vector<28x288xf32>,
    %c0_4 = arith.constant 0 : index
    %c0_5 = arith.constant 0 : index
    %c0_6 = arith.constant 0 : index
    %6 = vector.load %arg1[%c0_4, %c0_5, %c0_6] : memref<1x4x288xf32, #tpu.memory_space<vmem>>, vector<1x4x288xf32>
    %7 = vector.shape_cast %6 : vector<1x4x288xf32> to vector<4x288xf32>
    %c0_7 = arith.constant 0 : index
    %c19_8 = arith.constant 19 : index
    %8 = vector.load %arg6[%c0_7, %c19_8] : memref<32x326xf32, #tpu.memory_space<vmem>>, vector<4x288xf32>
    tpu.vector_store %arg6[%c0_7, %c19_8], %7 {strides = array<i32>} : memref<32x326xf32, #tpu.memory_space<vmem>>, vector<4x288xf32>,
    %c0_9 = arith.constant 0 : index
    %c0_10 = arith.constant 0 : index
    %9 = vector.load %arg2[%c0_9, %c0_10] : memref<1x288xf32, #tpu.memory_space<vmem>>, vector<1x288xf32>
    %c0_i32 = arith.constant 0 : i32
    %c5_i32 = arith.constant 5 : i32
    %10 = arith.addi %c0_i32, %c5_i32 : i32
    %c1_i32 = arith.constant 1 : i32
    scf.for %arg7 = %c0_i32 to %10 step %c1_i32  : i32 {
      %57 = arith.index_cast %arg7 : i32 to index
      %c0_40 = arith.constant 0 : index
      %c0_41 = arith.constant 0 : index
      %58 = vector.load %arg3[%57, %c0_40, %c0_41] : memref<6x32x288xf32, #tpu.memory_space<vmem>>, vector<1x32x288xf32>
      %59 = vector.shape_cast %58 : vector<1x32x288xf32> to vector<32x288xf32>
      %c0_42 = arith.constant 0 : index
      %c0_43 = arith.constant 0 : index
      %60 = vector.load %arg6[%c0_42, %c0_43] : memref<32x326xf32, #tpu.memory_space<vmem>>, vector<32x288xf32>
      %61 = vector.extract_strided_slice %59 {offsets = [0, 0], sizes = [32, 32], strides = [1, 1]} : vector<32x288xf32> to vector<32x32xf32>
      %cst_44 = arith.constant dense<0.000000e+00> : vector<32x288xf32>
      %62 = tpu.matmul %61, %60, %cst_44 {dimension_numbers = #tpu.dot_dimension_numbers<[1], [0], [0], [1], [0, 0, 1, 1], [], []>} : vector<32x32xf32>, vector<32x288xf32>, vector<32x288xf32> -> vector<32x288xf32>
      %c0_45 = arith.constant 0 : index
      %c1_46 = arith.constant 1 : index
      %63 = vector.load %arg6[%c0_45, %c1_46] : memref<32x326xf32, #tpu.memory_space<vmem>>, vector<32x288xf32>
      %64 = vector.extract_strided_slice %59 {offsets = [0, 32], sizes = [32, 32], strides = [1, 1]} : vector<32x288xf32> to vector<32x32xf32>
      %cst_47 = arith.constant dense<0.000000e+00> : vector<32x288xf32>
      %65 = tpu.matmul %64, %63, %cst_47 {dimension_numbers = #tpu.dot_dimension_numbers<[1], [0], [0], [1], [0, 0, 1, 1], [], []>} : vector<32x32xf32>, vector<32x288xf32>, vector<32x288xf32> -> vector<32x288xf32>
      %66 = arith.addf %62, %65 : vector<32x288xf32>
      %c0_48 = arith.constant 0 : index
      %c2_49 = arith.constant 2 : index
      %67 = vector.load %arg6[%c0_48, %c2_49] : memref<32x326xf32, #tpu.memory_space<vmem>>, vector<32x288xf32>
      %68 = vector.extract_strided_slice %59 {offsets = [0, 64], sizes = [32, 32], strides = [1, 1]} : vector<32x288xf32> to vector<32x32xf32>
      %cst_50 = arith.constant dense<0.000000e+00> : vector<32x288xf32>
      %69 = tpu.matmul %68, %67, %cst_50 {dimension_numbers = #tpu.dot_dimension_numbers<[1], [0], [0], [1], [0, 0, 1, 1], [], []>} : vector<32x32xf32>, vector<32x288xf32>, vector<32x288xf32> -> vector<32x288xf32>
      %70 = arith.addf %66, %69 : vector<32x288xf32>
      %c0_51 = arith.constant 0 : index
      %c18_52 = arith.constant 18 : index
      %71 = vector.load %arg6[%c0_51, %c18_52] : memref<32x326xf32, #tpu.memory_space<vmem>>, vector<32x288xf32>
      %72 = vector.extract_strided_slice %59 {offsets = [0, 96], sizes = [32, 32], strides = [1, 1]} : vector<32x288xf32> to vector<32x32xf32>
      %cst_53 = arith.constant dense<0.000000e+00> : vector<32x288xf32>
      %73 = tpu.matmul %72, %71, %cst_53 {dimension_numbers = #tpu.dot_dimension_numbers<[1], [0], [0], [1], [0, 0, 1, 1], [], []>} : vector<32x32xf32>, vector<32x288xf32>, vector<32x288xf32> -> vector<32x288xf32>
      %74 = arith.addf %70, %73 : vector<32x288xf32>
      %c0_54 = arith.constant 0 : index
      %c19_55 = arith.constant 19 : index
      %75 = vector.load %arg6[%c0_54, %c19_55] : memref<32x326xf32, #tpu.memory_space<vmem>>, vector<32x288xf32>
      %76 = vector.extract_strided_slice %59 {offsets = [0, 128], sizes = [32, 32], strides = [1, 1]} : vector<32x288xf32> to vector<32x32xf32>
      %cst_56 = arith.constant dense<0.000000e+00> : vector<32x288xf32>
      %77 = tpu.matmul %76, %75, %cst_56 {dimension_numbers = #tpu.dot_dimension_numbers<[1], [0], [0], [1], [0, 0, 1, 1], [], []>} : vector<32x32xf32>, vector<32x288xf32>, vector<32x288xf32> -> vector<32x288xf32>
      %78 = arith.addf %74, %77 : vector<32x288xf32>
      %c0_57 = arith.constant 0 : index
      %c20_58 = arith.constant 20 : index
      %79 = vector.load %arg6[%c0_57, %c20_58] : memref<32x326xf32, #tpu.memory_space<vmem>>, vector<32x288xf32>
      %80 = vector.extract_strided_slice %59 {offsets = [0, 160], sizes = [32, 32], strides = [1, 1]} : vector<32x288xf32> to vector<32x32xf32>
      %cst_59 = arith.constant dense<0.000000e+00> : vector<32x288xf32>
      %81 = tpu.matmul %80, %79, %cst_59 {dimension_numbers = #tpu.dot_dimension_numbers<[1], [0], [0], [1], [0, 0, 1, 1], [], []>} : vector<32x32xf32>, vector<32x288xf32>, vector<32x288xf32> -> vector<32x288xf32>
      %82 = arith.addf %78, %81 : vector<32x288xf32>
      %c0_60 = arith.constant 0 : index
      %c36_61 = arith.constant 36 : index
      %83 = vector.load %arg6[%c0_60, %c36_61] : memref<32x326xf32, #tpu.memory_space<vmem>>, vector<32x288xf32>
      %84 = vector.extract_strided_slice %59 {offsets = [0, 192], sizes = [32, 32], strides = [1, 1]} : vector<32x288xf32> to vector<32x32xf32>
      %cst_62 = arith.constant dense<0.000000e+00> : vector<32x288xf32>
      %85 = tpu.matmul %84, %83, %cst_62 {dimension_numbers = #tpu.dot_dimension_numbers<[1], [0], [0], [1], [0, 0, 1, 1], [], []>} : vector<32x32xf32>, vector<32x288xf32>, vector<32x288xf32> -> vector<32x288xf32>
      %86 = arith.addf %82, %85 : vector<32x288xf32>
      %c0_63 = arith.constant 0 : index
      %c37_64 = arith.constant 37 : index
      %87 = vector.load %arg6[%c0_63, %c37_64] : memref<32x326xf32, #tpu.memory_space<vmem>>, vector<32x288xf32>
      %88 = vector.extract_strided_slice %59 {offsets = [0, 224], sizes = [32, 32], strides = [1, 1]} : vector<32x288xf32> to vector<32x32xf32>
      %cst_65 = arith.constant dense<0.000000e+00> : vector<32x288xf32>
      %89 = tpu.matmul %88, %87, %cst_65 {dimension_numbers = #tpu.dot_dimension_numbers<[1], [0], [0], [1], [0, 0, 1, 1], [], []>} : vector<32x32xf32>, vector<32x288xf32>, vector<32x288xf32> -> vector<32x288xf32>
      %90 = arith.addf %86, %89 : vector<32x288xf32>
      %c0_66 = arith.constant 0 : index
      %c38_67 = arith.constant 38 : index
      %91 = vector.load %arg6[%c0_66, %c38_67] : memref<32x326xf32, #tpu.memory_space<vmem>>, vector<32x288xf32>
      %92 = vector.extract_strided_slice %59 {offsets = [0, 256], sizes = [32, 32], strides = [1, 1]} : vector<32x288xf32> to vector<32x32xf32>
      %cst_68 = arith.constant dense<0.000000e+00> : vector<32x288xf32>
      %93 = tpu.matmul %92, %91, %cst_68 {dimension_numbers = #tpu.dot_dimension_numbers<[1], [0], [0], [1], [0, 0, 1, 1], [], []>} : vector<32x32xf32>, vector<32x288xf32>, vector<32x288xf32> -> vector<32x288xf32>
      %94 = arith.addf %90, %93 : vector<32x288xf32>
      %95 = arith.index_cast %arg7 : i32 to index
      %c0_69 = arith.constant 0 : index
      %c0_70 = arith.constant 0 : index
      %96 = vector.load %arg4[%95, %c0_69, %c0_70] : memref<6x32x1xf32, #tpu.memory_space<vmem>>, vector<1x32x1xf32>
      %97 = vector.shape_cast %96 : vector<1x32x1xf32> to vector<32x1xf32>
      %98 = vector.broadcast %97 : vector<32x1xf32> to vector<32x288xf32>
      %99 = arith.addf %94, %98 : vector<32x288xf32>
      %cst_71 = arith.constant 0.000000e+00 : f32
      %100 = vector.broadcast %cst_71 : f32 to vector<32x288xf32>
      %101 = arith.maximumf %99, %100 : vector<32x288xf32>
      %102 = vector.broadcast %9 : vector<1x288xf32> to vector<32x288xf32>
      %103 = arith.mulf %101, %102 : vector<32x288xf32>
      %c0_72 = arith.constant 0 : index
      %c19_73 = arith.constant 19 : index
      %104 = vector.load %arg6[%c0_72, %c19_73] : memref<32x326xf32, #tpu.memory_space<vmem>>, vector<32x288xf32>
      tpu.vector_store %arg6[%c0_72, %c19_73], %103 {strides = array<i32>} : memref<32x326xf32, #tpu.memory_space<vmem>>, vector<32x288xf32>,
    }
    %c5_i32_11 = arith.constant 5 : i32
    %c5 = arith.constant 5 : index
    %c0_12 = arith.constant 0 : index
    %c0_13 = arith.constant 0 : index
    %11 = vector.load %arg3[%c5, %c0_12, %c0_13] : memref<6x32x288xf32, #tpu.memory_space<vmem>>, vector<1x32x288xf32>
    %12 = vector.shape_cast %11 : vector<1x32x288xf32> to vector<32x288xf32>
    %c0_14 = arith.constant 0 : index
    %c0_15 = arith.constant 0 : index
    %13 = vector.load %arg6[%c0_14, %c0_15] : memref<32x326xf32, #tpu.memory_space<vmem>>, vector<32x288xf32>
    %14 = vector.extract_strided_slice %12 {offsets = [0, 0], sizes = [32, 32], strides = [1, 1]} : vector<32x288xf32> to vector<32x32xf32>
    %cst_16 = arith.constant dense<0.000000e+00> : vector<32x288xf32>
    %15 = tpu.matmul %14, %13, %cst_16 {dimension_numbers = #tpu.dot_dimension_numbers<[1], [0], [0], [1], [0, 0, 1, 1], [], []>} : vector<32x32xf32>, vector<32x288xf32>, vector<32x288xf32> -> vector<32x288xf32>
    %c0_17 = arith.constant 0 : index
    %c1 = arith.constant 1 : index
    %16 = vector.load %arg6[%c0_17, %c1] : memref<32x326xf32, #tpu.memory_space<vmem>>, vector<32x288xf32>
    %17 = vector.extract_strided_slice %12 {offsets = [0, 32], sizes = [32, 32], strides = [1, 1]} : vector<32x288xf32> to vector<32x32xf32>
    %cst_18 = arith.constant dense<0.000000e+00> : vector<32x288xf32>
    %18 = tpu.matmul %17, %16, %cst_18 {dimension_numbers = #tpu.dot_dimension_numbers<[1], [0], [0], [1], [0, 0, 1, 1], [], []>} : vector<32x32xf32>, vector<32x288xf32>, vector<32x288xf32> -> vector<32x288xf32>
    %19 = arith.addf %15, %18 : vector<32x288xf32>
    %c0_19 = arith.constant 0 : index
    %c2 = arith.constant 2 : index
    %20 = vector.load %arg6[%c0_19, %c2] : memref<32x326xf32, #tpu.memory_space<vmem>>, vector<32x288xf32>
    %21 = vector.extract_strided_slice %12 {offsets = [0, 64], sizes = [32, 32], strides = [1, 1]} : vector<32x288xf32> to vector<32x32xf32>
    %cst_20 = arith.constant dense<0.000000e+00> : vector<32x288xf32>
    %22 = tpu.matmul %21, %20, %cst_20 {dimension_numbers = #tpu.dot_dimension_numbers<[1], [0], [0], [1], [0, 0, 1, 1], [], []>} : vector<32x32xf32>, vector<32x288xf32>, vector<32x288xf32> -> vector<32x288xf32>
    %23 = arith.addf %19, %22 : vector<32x288xf32>
    %c0_21 = arith.constant 0 : index
    %c18 = arith.constant 18 : index
    %24 = vector.load %arg6[%c0_21, %c18] : memref<32x326xf32, #tpu.memory_space<vmem>>, vector<32x288xf32>
    %25 = vector.extract_strided_slice %12 {offsets = [0, 96], sizes = [32, 32], strides = [1, 1]} : vector<32x288xf32> to vector<32x32xf32>
    %cst_22 = arith.constant dense<0.000000e+00> : vector<32x288xf32>
    %26 = tpu.matmul %25, %24, %cst_22 {dimension_numbers = #tpu.dot_dimension_numbers<[1], [0], [0], [1], [0, 0, 1, 1], [], []>} : vector<32x32xf32>, vector<32x288xf32>, vector<32x288xf32> -> vector<32x288xf32>
    %27 = arith.addf %23, %26 : vector<32x288xf32>
    %c0_23 = arith.constant 0 : index
    %c19_24 = arith.constant 19 : index
    %28 = vector.load %arg6[%c0_23, %c19_24] : memref<32x326xf32, #tpu.memory_space<vmem>>, vector<32x288xf32>
    %29 = vector.extract_strided_slice %12 {offsets = [0, 128], sizes = [32, 32], strides = [1, 1]} : vector<32x288xf32> to vector<32x32xf32>
    %cst_25 = arith.constant dense<0.000000e+00> : vector<32x288xf32>
    %30 = tpu.matmul %29, %28, %cst_25 {dimension_numbers = #tpu.dot_dimension_numbers<[1], [0], [0], [1], [0, 0, 1, 1], [], []>} : vector<32x32xf32>, vector<32x288xf32>, vector<32x288xf32> -> vector<32x288xf32>
    %31 = arith.addf %27, %30 : vector<32x288xf32>
    %c0_26 = arith.constant 0 : index
    %c20 = arith.constant 20 : index
    %32 = vector.load %arg6[%c0_26, %c20] : memref<32x326xf32, #tpu.memory_space<vmem>>, vector<32x288xf32>
    %33 = vector.extract_strided_slice %12 {offsets = [0, 160], sizes = [32, 32], strides = [1, 1]} : vector<32x288xf32> to vector<32x32xf32>
    %cst_27 = arith.constant dense<0.000000e+00> : vector<32x288xf32>
    %34 = tpu.matmul %33, %32, %cst_27 {dimension_numbers = #tpu.dot_dimension_numbers<[1], [0], [0], [1], [0, 0, 1, 1], [], []>} : vector<32x32xf32>, vector<32x288xf32>, vector<32x288xf32> -> vector<32x288xf32>
    %35 = arith.addf %31, %34 : vector<32x288xf32>
    %c0_28 = arith.constant 0 : index
    %c36 = arith.constant 36 : index
    %36 = vector.load %arg6[%c0_28, %c36] : memref<32x326xf32, #tpu.memory_space<vmem>>, vector<32x288xf32>
    %37 = vector.extract_strided_slice %12 {offsets = [0, 192], sizes = [32, 32], strides = [1, 1]} : vector<32x288xf32> to vector<32x32xf32>
    %cst_29 = arith.constant dense<0.000000e+00> : vector<32x288xf32>
    %38 = tpu.matmul %37, %36, %cst_29 {dimension_numbers = #tpu.dot_dimension_numbers<[1], [0], [0], [1], [0, 0, 1, 1], [], []>} : vector<32x32xf32>, vector<32x288xf32>, vector<32x288xf32> -> vector<32x288xf32>
    %39 = arith.addf %35, %38 : vector<32x288xf32>
    %c0_30 = arith.constant 0 : index
    %c37 = arith.constant 37 : index
    %40 = vector.load %arg6[%c0_30, %c37] : memref<32x326xf32, #tpu.memory_space<vmem>>, vector<32x288xf32>
    %41 = vector.extract_strided_slice %12 {offsets = [0, 224], sizes = [32, 32], strides = [1, 1]} : vector<32x288xf32> to vector<32x32xf32>
    %cst_31 = arith.constant dense<0.000000e+00> : vector<32x288xf32>
    %42 = tpu.matmul %41, %40, %cst_31 {dimension_numbers = #tpu.dot_dimension_numbers<[1], [0], [0], [1], [0, 0, 1, 1], [], []>} : vector<32x32xf32>, vector<32x288xf32>, vector<32x288xf32> -> vector<32x288xf32>
    %43 = arith.addf %39, %42 : vector<32x288xf32>
    %c0_32 = arith.constant 0 : index
    %c38 = arith.constant 38 : index
    %44 = vector.load %arg6[%c0_32, %c38] : memref<32x326xf32, #tpu.memory_space<vmem>>, vector<32x288xf32>
    %45 = vector.extract_strided_slice %12 {offsets = [0, 256], sizes = [32, 32], strides = [1, 1]} : vector<32x288xf32> to vector<32x32xf32>
    %cst_33 = arith.constant dense<0.000000e+00> : vector<32x288xf32>
    %46 = tpu.matmul %45, %44, %cst_33 {dimension_numbers = #tpu.dot_dimension_numbers<[1], [0], [0], [1], [0, 0, 1, 1], [], []>} : vector<32x32xf32>, vector<32x288xf32>, vector<32x288xf32> -> vector<32x288xf32>
    %47 = arith.addf %43, %46 : vector<32x288xf32>
    %c5_34 = arith.constant 5 : index
    %c0_35 = arith.constant 0 : index
    %c0_36 = arith.constant 0 : index
    %48 = vector.load %arg4[%c5_34, %c0_35, %c0_36] : memref<6x32x1xf32, #tpu.memory_space<vmem>>, vector<1x32x1xf32>
    %49 = vector.shape_cast %48 : vector<1x32x1xf32> to vector<32x1xf32>
    %50 = vector.broadcast %49 : vector<32x1xf32> to vector<32x288xf32>
    %51 = arith.addf %47, %50 : vector<32x288xf32>
    %52 = vector.extract_strided_slice %51 {offsets = [0, 0], sizes = [4, 288], strides = [1, 1]} : vector<32x288xf32> to vector<4x288xf32>
    %53 = arith.subf %7, %52 : vector<4x288xf32>
    %c0_37 = arith.constant 0 : index
    %c0_38 = arith.constant 0 : index
    %c0_39 = arith.constant 0 : index
    %54 = vector.load %arg5[%c0_37, %c0_38, %c0_39] : memref<1x4x288xf32, #tpu.memory_space<vmem>>, vector<1x4x288xf32>
    %55 = vector.shape_cast %54 : vector<1x4x288xf32> to vector<4x288xf32>
    %56 = vector.shape_cast %53 : vector<4x288xf32> to vector<1x4x288xf32>
    tpu.vector_store %arg5[%c0_37, %c0_38, %c0_39], %56 {strides = array<i32>} : memref<1x4x288xf32, #tpu.memory_space<vmem>>, vector<1x4x288xf32>,
    return
  }
  func.func @transform_0(%arg0: i32) -> (i32, i32, i32) {
    %c0_i32 = arith.constant 0 : i32
    %c0_i32_0 = arith.constant 0 : i32
    %c0_i32_1 = arith.constant 0 : i32
    return %arg0, %c0_i32, %c0_i32_0 : i32, i32, i32
  }
  func.func @transform_1(%arg0: i32) -> (i32, i32) {
    %c0_i32 = arith.constant 0 : i32
    %c0_i32_0 = arith.constant 0 : i32
    %c0_i32_1 = arith.constant 0 : i32
    return %c0_i32, %c0_i32_0 : i32, i32
  }
  func.func @transform_2(%arg0: i32) -> (i32, i32, i32) {
    %c0_i32 = arith.constant 0 : i32
    %c0_i32_0 = arith.constant 0 : i32
    %c0_i32_1 = arith.constant 0 : i32
    %c0_i32_2 = arith.constant 0 : i32
    return %c0_i32, %c0_i32_0, %c0_i32_1 : i32, i32, i32
  }
  func.func @transform_3(%arg0: i32) -> (i32, i32, i32) {
    %c0_i32 = arith.constant 0 : i32
    %c0_i32_0 = arith.constant 0 : i32
    %c0_i32_1 = arith.constant 0 : i32
    %c0_i32_2 = arith.constant 0 : i32
    return %c0_i32, %c0_i32_0, %c0_i32_1 : i32, i32, i32
  }
  func.func @transform_4(%arg0: i32) -> (i32, i32, i32) {
    %c0_i32 = arith.constant 0 : i32
    %c0_i32_0 = arith.constant 0 : i32
    %c0_i32_1 = arith.constant 0 : i32
    return %arg0, %c0_i32, %c0_i32_0 : i32, i32, i32
  }
}

</mosaic_0001>

<llo_original>
// kernel: dncnn_forward_pallas.1
$region0: #{dncnn_forward_pallas.1}
  #allocation0 [shape = 'u32[]', space=smem, size = 0x4, offset = 0x4, fixed_abs, tag = 'smem constant byte address 0x4 - core index']
  #allocation1 [shape = 'u32[72,128]{1,0:T(1,128)}', space=vmem, size = 0x9000, scoped, tag = 'internal scratch']
  #allocation2 [shape = 'f32[32,326]{1,0:T(8,128)}', space=vmem, size = 0xc000, scoped, tag = 'scratch operand']
  %s0 = inlined_call_operand.vmem [shape: f32[2,4,288], index: 0, kind: input, shape index: {}]
  %s1 = inlined_call_operand.vmem [shape: f32[1,288], index: 1, kind: input, shape index: {}]
  %s2 = inlined_call_operand.hbm [shape: f32[6,32,288], index: 2, kind: input, shape index: {}]
  %s3 = inlined_call_operand.vmem [shape: f32[6,32,1], index: 3, kind: input, shape index: {}]
  %s4 = inlined_call_operand.vmem [shape: f32[2,4,288], index: 4, kind: output, shape index: {}]
  %s5 = sld [smem:[#allocation0]]
  $region60: #{dncnn_forward_pallas.1} parent=0
    _
  %s7 = ssub.s32 1, %s5
  %s8 = scalar_select 0, %s7, %s5
  $region1: #{dncnn_forward_pallas.1} parent=0
    #allocation3 [shape = 'u8[294912]{0}', space=vmem, size = 0x48000, scoped, tag = 'input window, operand 2, single buffered']
    #allocation4 [shape = 's32[2]{0}', space=sflag, size = 0x8, scoped, tag = 'scoped memory for dncnn_forward_pallas.1']
    %9 = vsyncpa [#allocation4], 0
    loop: start=0, step=1, limit=4
    $region2: #{dncnn_forward_pallas.1} parent=1 // loop_pre_header
      _
    $region3: #{dncnn_forward_pallas.1} parent=1 // loop_header
      %s11 = sphi 0, %s15
      %p12 = scmp.ge.s32.totalorder %s11, 4
      %s21 = sphi 0, %s23
      %s24 = sphi 0, %s21
      %s25 = sphi 0, %s24
      %s41 = sphi 0, %s25
      %s45 = sphi 0, %s45
      %s47 = sphi 0, %s45
      %s48 = sphi 0, %s47
      %s62 = sphi 0, %s48
      %s66 = sphi 0, %s66
      %s68 = sphi 0, %s66
      %s69 = sphi 0, %s68
      %s83 = sphi 0, %s69
      %s87 = sphi 0, %s87
      %s89 = sphi 0, %s87
      %s90 = sphi 0, %s89
      %s104 = sphi 0, %s90
      %s110 = sphi 0, %s112
      %s113 = sphi 0, %s110
      %s114 = sphi 0, %s113
      %s130 = sphi 0, %s114
    $region4: #{dncnn_forward_pallas.1} parent=1 // loop_header_branch
      %14 = sbr.rel (%p12) target = $region8
    $region5: #{dncnn_forward_pallas.1} parent=1 // loop_body
      %s16 = ssub.s32 %s11, 1
      %s17 = ssub.s32 %s11, 2
      %s18 = sadd.s32 %s11, 1
      %s19 = ssub.s32 %s11, %s18
      %p20 = scmp.eq.s32.totalorder %s19, 0
      %s22 = sadd.s32 %s21, 1
      %s23 = scalar_select %p20, %s21, %s22
      %p26 = pneg %p20
      %p27 = scmp.eq.s32.totalorder %s11, 1
      %p28 = por %p26, %p27
      %p29 = scmp.ne.s32.totalorder %s21, %s24
      %p30 = scmp.eq.s32.totalorder %s11, 0
      %p31 = por %p29, %p30
      %p32 = scmp.ne.s32.totalorder %s21, %s24
      %p33 = scmp.eq.s32.totalorder %s16, 1
      %p34 = por %p32, %p33
      %p35 = scmp.ne.s32.totalorder %s24, %s25
      %p36 = scmp.eq.s32.totalorder %s16, 0
      %p37 = por %p35, %p36
      %p38 = scmp.ne.s32.totalorder %s24, %s25
      %p39 = scmp.eq.s32.totalorder %s17, 1
      %p40 = por %p38, %p39
      %p42 = scmp.ne.s32.totalorder %s25, %s41
      %p43 = scmp.eq.s32.totalorder %s17, 0
      %p44 = por %p42, %p43
      %s46 = sadd.s32 %s45, 1
      %p49 = scmp.eq.s32.totalorder %s11, 1
      %p50 = scmp.ne.s32.totalorder %s45, %s47
      %p51 = scmp.eq.s32.totalorder %s11, 0
      %p52 = por %p50, %p51
      %p53 = scmp.ne.s32.totalorder %s45, %s47
      %p54 = scmp.eq.s32.totalorder %s16, 1
      %p55 = por %p53, %p54
      %p56 = scmp.ne.s32.totalorder %s47, %s48
      %p57 = scmp.eq.s32.totalorder %s16, 0
      %p58 = por %p56, %p57
      %p59 = scmp.ne.s32.totalorder %s47, %s48
      %p60 = scmp.eq.s32.totalorder %s17, 1
      %p61 = por %p59, %p60
      %p63 = scmp.ne.s32.totalorder %s48, %s62
      %p64 = scmp.eq.s32.totalorder %s17, 0
      %p65 = por %p63, %p64
      %s67 = sadd.s32 %s66, 1
      %p70 = scmp.eq.s32.totalorder %s11, 1
      %p71 = scmp.ne.s32.totalorder %s66, %s68
      %p72 = scmp.eq.s32.totalorder %s11, 0
      %p73 = por %p71, %p72
      %p74 = scmp.ne.s32.totalorder %s66, %s68
      %p75 = scmp.eq.s32.totalorder %s16, 1
      %p76 = por %p74, %p75
      %p77 = scmp.ne.s32.totalorder %s68, %s69
      %p78 = scmp.eq.s32.totalorder %s16, 0
      %p79 = por %p77, %p78
      %p80 = scmp.ne.s32.totalorder %s68, %s69
      %p81 = scmp.eq.s32.totalorder %s17, 1
      %p82 = por %p80, %p81
      %p84 = scmp.ne.s32.totalorder %s69, %s83
      %p85 = scmp.eq.s32.totalorder %s17, 0
      %p86 = por %p84, %p85
      %s88 = sadd.s32 %s87, 1
      %p91 = scmp.eq.s32.totalorder %s11, 1
      %p92 = scmp.ne.s32.totalorder %s87, %s89
      %p93 = scmp.eq.s32.totalorder %s11, 0
      %p94 = por %p92, %p93
      %p95 = scmp.ne.s32.totalorder %s87, %s89
      %p96 = scmp.eq.s32.totalorder %s16, 1
      %p97 = por %p95, %p96
      %p98 = scmp.ne.s32.totalorder %s89, %s90
      %p99 = scmp.eq.s32.totalorder %s16, 0
      %p100 = por %p98, %p99
      %p101 = scmp.ne.s32.totalorder %s89, %s90
      %p102 = scmp.eq.s32.totalorder %s17, 1
      %p103 = por %p101, %p102
      %p105 = scmp.ne.s32.totalorder %s90, %s104
      %p106 = scmp.eq.s32.totalorder %s17, 0
      %p107 = por %p105, %p106
      %s108 = ssub.s32 %s11, %s18
      %p109 = scmp.eq.s32.totalorder %s108, 0
      %s111 = sadd.s32 %s110, 1
      %s112 = scalar_select %p109, %s110, %s111
      %p115 = pneg %p109
      %p116 = scmp.eq.s32.totalorder %s11, 1
      %p117 = por %p115, %p116
      %p118 = scmp.ne.s32.totalorder %s110, %s113
      %p119 = scmp.eq.s32.totalorder %s11, 0
      %p120 = por %p118, %p119
      %p121 = scmp.ne.s32.totalorder %s110, %s113
      %p122 = scmp.eq.s32.totalorder %s16, 1
      %p123 = por %p121, %p122
      %p124 = scmp.ne.s32.totalorder %s113, %s114
      %p125 = scmp.eq.s32.totalorder %s16, 0
      %p126 = por %p124, %p125
      %p127 = scmp.ne.s32.totalorder %s113, %s114
      %p128 = scmp.eq.s32.totalorder %s17, 1
      %p129 = por %p127, %p128
      %p131 = scmp.ne.s32.totalorder %s114, %s130
      %p132 = scmp.eq.s32.totalorder %s17, 0
      %p133 = por %p131, %p132
      %p134 = scmp.le.s32.totalorder 1, %s11
      %p135 = scmp.lt.s32.totalorder %s11, 3
      %p136 = pnand %p134, %p135
      %p137 = pneg %p136
      // Predicated region
      $region9: #{dncnn_forward_pallas.1} parent=5 // pred_check
        _
      $region10: #{dncnn_forward_pallas.1} parent=5 // pred_check_branch
        %139 = sbr.rel (%p136) target = $region12
      $region11: #{dncnn_forward_pallas.1} parent=5 // pred_region
        %s140 = ssub.s32 %s11, 1
        // Predicated region
        $region13: #{dncnn_forward_pallas.1} parent=11 // pred_check
          %p141 = pneg %p58
        $region14: #{dncnn_forward_pallas.1} parent=11 // pred_check_branch
          %143 = sbr.rel (%p141) target = $region16
        $region15: #{dncnn_forward_pallas.1} parent=11 // pred_region
          _
        $region16: #{dncnn_forward_pallas.1} parent=11 // pred_fallthru
          _
        // Predicated region
        $region17: #{dncnn_forward_pallas.1} parent=11 // pred_check
          %p144 = pneg %p79
        $region18: #{dncnn_forward_pallas.1} parent=11 // pred_check_branch
          %146 = sbr.rel (%p144) target = $region20
        $region19: #{dncnn_forward_pallas.1} parent=11 // pred_region
          %148 = vsyncadd [#allocation4], 0
          %s149 = sshll.u32 %s2, 4
          %s150 = int_to_ptr.hbm [resolvable:$true] %s149
          %s151 = sshll.u32 [#allocation3], 4
          %s152 = int_to_ptr.vmem [resolvable:$true] %s151
          %157 = dma.hbm_to_vmem [thread:$0]  %s150, 9216, %s152, [#allocation4], 384, 384, 24
        $region20: #{dncnn_forward_pallas.1} parent=11 // pred_fallthru
          _
        // Predicated region
        $region21: #{dncnn_forward_pallas.1} parent=11 // pred_check
          %p158 = pneg %p100
        $region22: #{dncnn_forward_pallas.1} parent=11 // pred_check_branch
          %160 = sbr.rel (%p158) target = $region24
        $region23: #{dncnn_forward_pallas.1} parent=11 // pred_region
          _
        $region24: #{dncnn_forward_pallas.1} parent=11 // pred_fallthru
          _
      $region12: #{dncnn_forward_pallas.1} parent=5 // pred_fallthru
        _
      %p161 = scmp.lt.s32.totalorder %s11, 2
      // Predicated region
      $region25: #{dncnn_forward_pallas.1} parent=5 // pred_check
        %p162 = pneg %p161
      $region26: #{dncnn_forward_pallas.1} parent=5 // pred_check_branch
        %164 = sbr.rel (%p162) target = $region28
      $region27: #{dncnn_forward_pallas.1} parent=5 // pred_region
        // Predicated region
        $region29: #{dncnn_forward_pallas.1} parent=27 // pred_check
          %p165 = pneg %p31
        $region30: #{dncnn_forward_pallas.1} parent=27 // pred_check_branch
          %167 = sbr.rel (%p165) target = $region32
        $region31: #{dncnn_forward_pallas.1} parent=27 // pred_region
          %p168 = scmp.lt.s32.totalorder %s11, 1
          %s169 = scalar_select %p168, %s11, 1
          %s170 = smul.addr %s169, 3
          %s171 = smul.addr %s170, 4
          %s172 = scalar_lea.vmem %s0, %s171
        $region32: #{dncnn_forward_pallas.1} parent=27 // pred_fallthru
          _
      $region28: #{dncnn_forward_pallas.1} parent=5 // pred_fallthru
        _
      %p173 = scmp.le.s32.totalorder 1, %s11
      %p174 = scmp.lt.s32.totalorder %s11, 3
      %p175 = pnand %p173, %p174
      %p176 = pneg %p175
      // Predicated region
      $region33: #{dncnn_forward_pallas.1} parent=5 // pred_check
        _
      $region34: #{dncnn_forward_pallas.1} parent=5 // pred_check_branch
        %178 = sbr.rel (%p175) target = $region36
      $region35: #{dncnn_forward_pallas.1} parent=5 // pred_region
        %s179 = ssub.s32 %s11, 1
        // Predicated region
        $region37: #{dncnn_forward_pallas.1} parent=35 // pred_check
          %p180 = pneg %p79
        $region38: #{dncnn_forward_pallas.1} parent=35 // pred_check_branch
          %182 = sbr.rel (%p180) target = $region40
        $region39: #{dncnn_forward_pallas.1} parent=35 // pred_region
          %184 = dma.done [#allocation4], 9216
        $region40: #{dncnn_forward_pallas.1} parent=35 // pred_fallthru
          _
        %p185 = scmp.lt.s32.totalorder %s16, 1
        %s186 = scalar_select %p185, %s16, 1
        %s187 = smul.addr %s186, 3
        %s188 = smul.addr %s187, 4
        %s189 = scalar_lea.vmem %s0, %s188
        %p190 = pneg %p37
        %p191 = pneg %p34
        %p192 = pneg %p58
        %p193 = pneg %p55
        %p194 = pneg %p79
        %p195 = pneg %p76
        %p196 = pneg %p100
        %p197 = pneg %p97
        %p198 = pneg %p126
        %p199 = pneg %p123
        %p200 = scmp.lt.s32.totalorder %s16, 1
        %s201 = scalar_select %p200, %s16, 1
        %s202 = smul.addr %s201, 3
        %s203 = smul.addr %s202, 4
        %s204 = scalar_lea.vmem %s4, %s203
        %p205 = scmp.lt.s32.totalorder %s16, 1
        %s206 = scalar_select %p205, %s16, 1
        %s207 = smul.addr %s206, 3
        %s208 = smul.addr %s207, 4
        %s209 = scalar_lea.vmem %s0, %s208
        %p210 = scmp.lt.s32.totalorder %s16, 1
        %s211 = scalar_select %p210, %s16, 1
        %s212 = smul.addr %s211, 3
        %s213 = smul.addr %s212, 4
        %s214 = scalar_lea.vmem %s4, %s213
        %vm215 = vcmask 154624
        %216 = vst.msk [vmem:[#allocation2] sm:$0xff] %vm215, 0.0
        %217 = vst.msk [vmem:[#allocation2 + $0x18] sm:$0xff] %vm215, 0.0
        %218 = vst.msk [vmem:[#allocation2 + $0x30] sm:$0xff] %vm215, 0.0
        %219 = vst.msk [vmem:[#allocation2 + $0x48] sm:$0xff] %vm215, 0.0
        %vm220 = vcmask 572824
        %221 = vst.msk [vmem:[#allocation2 + $0x10] sm:$0xff] %vm220, 0.0
        %222 = vst.msk [vmem:[#allocation2 + $0x28] sm:$0xff] %vm220, 0.0
        %223 = vst.msk [vmem:[#allocation2 + $0x40] sm:$0xff] %vm220, 0.0
        %224 = vst.msk [vmem:[#allocation2 + $0x58] sm:$0xff] %vm220, 0.0
        %vm225 = vcmask 1047708
        %226 = vst.msk [vmem:[#allocation2] sm:$0xf0] %vm225, 0.0
        %227 = vst [vmem:[#allocation2 + $0x8] sm:$0xf0] 0.0
        %vm228 = vcmask 416772
        %229 = vst.msk [vmem:[#allocation2 + $0x10] sm:$0xf0] %vm228, 0.0
        %vm230 = vcmask 1047704
        %231 = vst.msk [vmem:[#allocation2 + $0x18] sm:$0xff] %vm230, 0.0
        %232 = vst [vmem:[#allocation2 + $0x20] sm:$0xff] 0.0
        %vm233 = vcmask 416768
        %234 = vst.msk [vmem:[#allocation2 + $0x28] sm:$0xff] %vm233, 0.0
        %235 = vst.msk [vmem:[#allocation2 + $0x30] sm:$0xff] %vm230, 0.0
        %236 = vst [vmem:[#allocation2 + $0x38] sm:$0xff] 0.0
        %237 = vst.msk [vmem:[#allocation2 + $0x40] sm:$0xff] %vm233, 0.0
        %238 = vst.msk [vmem:[#allocation2 + $0x48] sm:$0xff] %vm230, 0.0
        %239 = vst [vmem:[#allocation2 + $0x50] sm:$0xff] 0.0
        %240 = vst.msk [vmem:[#allocation2 + $0x58] sm:$0xff] %vm233, 0.0
        %v241 = vld [vmem:[%s209] sm:$0xff]
        %v242 = vld [vmem:[%s209 + $0x8] sm:$0xf]
        %245 = vst [vmem:[#allocation1] ss:$2 sm:$0xff] %v241
        %s246 = scalar_lea.vmem [#allocation1], 16
        %247 = vst [vmem:[%s246] ss:$2 sm:$0xff] %v242
        %v248 = vld.sshfl [vmem:[#allocation1] sm:$0xff pattern:$0x75316420]
        %v249 = vld.sshfl [vmem:[#allocation1 + $0x8] sm:$0xff pattern:$0x75316420]
        %v250 = vld.sshfl [vmem:[#allocation1 + $0x10] sm:$0xff pattern:$0x75316420]
        %251 = vrot.lane.b32.xlu0 %v248, 19
        %v252 = vpop.permute.xlu0 %251
        %253 = vrot.lane.b32.xlu0 %v249, 19
        %v254 = vpop.permute.xlu0 %253
        %255 = vrot.lane.b32.xlu0 %v250, 19
        %v256 = vpop.permute.xlu0 %255
        %v257 = vsel %vm215, %v252, %v254
        %v258 = vsel %vm215, %v254, %v256
        %vm262 = vcmask 1043608
        %263 = vst.msk [vmem:[#allocation2] sm:$0xf] %vm262, %v252
        %264 = vst [vmem:[#allocation2 + $0x8] sm:$0xf] %v257
        %vm265 = vcmask 412672
        %266 = vst.msk [vmem:[#allocation2 + $0x10] sm:$0xf] %vm265, %v258
        %v267 = vld [vmem:[%s1] sm:$0x7]
        loop: start=0, step=1, limit=5
        $region41: #{dncnn_forward_pallas.1} parent=35 // loop_pre_header
          _
        $region42: #{dncnn_forward_pallas.1} parent=35 // loop_header
          %s269 = sphi 0, %s273
          %p270 = scmp.ge.s32.totalorder %s269, 5
        $region43: #{dncnn_forward_pallas.1} parent=35 // loop_header_branch
          %272 = sbr.rel (%p270) target = $region47
        $region44: #{dncnn_forward_pallas.1} parent=35 // loop_body
          %s274 = smul.u32 %s269, 12
          %s275 = smul.addr %s274, 8
          %s276 = scalar_lea.vmem [#allocation3], %s275
          %v277 = vld [vmem:[%s276] sm:$0xff]
          %v278 = vld [vmem:[%s276 + $0x8] sm:$0xff]
          %v279 = vld [vmem:[%s276 + $0x10] sm:$0xff]
          %v280 = vld [vmem:[%s276 + $0x18] sm:$0xff]
          %v281 = vld [vmem:[%s276 + $0x20] sm:$0xff]
          %v282 = vld [vmem:[%s276 + $0x28] sm:$0xff]
          %v283 = vld [vmem:[%s276 + $0x30] sm:$0xff]
          %v284 = vld [vmem:[%s276 + $0x38] sm:$0xff]
          %v285 = vld [vmem:[%s276 + $0x40] sm:$0xff]
          %v286 = vld [vmem:[%s276 + $0x48] sm:$0xff]
          %v287 = vld [vmem:[%s276 + $0x50] sm:$0xff]
          %v288 = vld [vmem:[%s276 + $0x58] sm:$0xff]
          %v289 = vld [vmem:[#allocation2] sm:$0xff]
          %v290 = vld [vmem:[#allocation2 + $0x8] sm:$0xff]
          %v291 = vld [vmem:[#allocation2 + $0x10] sm:$0xff]
          %v292 = vld [vmem:[#allocation2 + $0x18] sm:$0xff]
          %v293 = vld [vmem:[#allocation2 + $0x20] sm:$0xff]
          %v294 = vld [vmem:[#allocation2 + $0x28] sm:$0xff]
          %v295 = vld [vmem:[#allocation2 + $0x30] sm:$0xff]
          %v296 = vld [vmem:[#allocation2 + $0x38] sm:$0xff]
          %v297 = vld [vmem:[#allocation2 + $0x40] sm:$0xff]
          %v298 = vld [vmem:[#allocation2 + $0x48] sm:$0xff]
          %v299 = vld [vmem:[#allocation2 + $0x50] sm:$0xff]
          %v300 = vld [vmem:[#allocation2 + $0x58] sm:$0xff]
          %305 = vrot.lane.b32.xlu0 %v277, 96
          %v306 = vpop.permute.xlu0 %305
          %307 = vrot.lane.b32.xlu0 %v280, 96
          %v308 = vpop.permute.xlu0 %307
          %309 = vrot.lane.b32.xlu0 %v283, 96
          %v310 = vpop.permute.xlu0 %309
          %311 = vrot.lane.b32.xlu0 %v286, 96
          %v312 = vpop.permute.xlu0 %311
          %325 = vrot.lane.b32.xlu0 %v289, 127
          %v326 = vpop.permute.xlu0 %325
          %327 = vrot.lane.b32.xlu0 %v290, 127
          %v328 = vpop.permute.xlu0 %327
          %329 = vrot.lane.b32.xlu0 %v291, 127
          %v330 = vpop.permute.xlu0 %329
          %331 = vrot.lane.b32.xlu0 %v292, 127
          %v332 = vpop.permute.xlu0 %331
          %333 = vrot.lane.b32.xlu0 %v293, 127
          %v334 = vpop.permute.xlu0 %333
          %335 = vrot.lane.b32.xlu0 %v294, 127
          %v336 = vpop.permute.xlu0 %335
          %337 = vrot.lane.b32.xlu0 %v295, 127
          %v338 = vpop.permute.xlu0 %337
          %339 = vrot.lane.b32.xlu0 %v296, 127
          %v340 = vpop.permute.xlu0 %339
          %341 = vrot.lane.b32.xlu0 %v297, 127
          %v342 = vpop.permute.xlu0 %341
          %343 = vrot.lane.b32.xlu0 %v298, 127
          %v344 = vpop.permute.xlu0 %343
          %345 = vrot.lane.b32.xlu0 %v299, 127
          %v346 = vpop.permute.xlu0 %345
          %347 = vrot.lane.b32.xlu0 %v300, 127
          %v348 = vpop.permute.xlu0 %347
          %vm349 = vcmask 1039360
          %v350 = vsel %vm349, %v326, %v328
          %v351 = vsel %vm349, %v328, %v330
          %v352 = vsel %vm349, %v332, %v334
          %v353 = vsel %vm349, %v334, %v336
          %v354 = vsel %vm349, %v338, %v340
          %v355 = vsel %vm349, %v340, %v342
          %v356 = vsel %vm349, %v344, %v346
          %v357 = vsel %vm349, %v346, %v348
          %vm370 = vcmask 261120
          %v371 = vsel %vm370, %v306, 0
          %v373 = vsel %vm370, %v308, 0
          %v375 = vsel %vm370, %v310, 0
          %v377 = vsel %vm370, %v312, 0
          %379 = vmatpush.msra.mxu0 0.0
          %380 = vmatpush.msra.mxu0 0.0
          %381 = vmatpush.msra.mxu0 0.0
          %382 = vmatpush.msra.mxu0 0.0
          %383 = vmatpush.msra.mxu0 0.0
          %384 = vmatpush.msra.mxu0 0.0
          %385 = vmatpush.msra.mxu0 0.0
          %386 = vmatpush.msra.mxu0 0.0
          %387 = vmatpush.msra.mxu0 0.0
          %388 = vmatpush.msra.mxu0 0.0
          %389 = vmatpush.msra.mxu0 0.0
          %390 = vmatpush.msra.mxu0 0.0
          %391 = vmatpush.msra.mxu0 %v356
          %392 = vmatpush.msra.mxu0 %v354
          %393 = vmatpush.msra.mxu0 %v352
          %394 = vmatpush.msra.mxu0 %v350
          %395 = vmatmul.f32.gmra.mxu0 %v371
          %v396 = vpop.f32.mrf.mxu0
          %v397 = vadd.f32 0.0, %v396
          %398 = vmatmul.f32.gmra.mxu0 %v373
          %v399 = vpop.f32.mrf.mxu0
          %v400 = vadd.f32 0.0, %v399
          %401 = vmatmul.f32.gmra.mxu0 %v375
          %v402 = vpop.f32.mrf.mxu0
          %v403 = vadd.f32 0.0, %v402
          %404 = vmatmul.f32.gmra.mxu0 %v377
          %v405 = vpop.f32.mrf.mxu0
          %v406 = vadd.f32 0.0, %v405
          %407 = vdwg.mxu0
          %408 = vmatpush.msra.mxu0 0.0
          %409 = vmatpush.msra.mxu0 0.0
          %410 = vmatpush.msra.mxu0 0.0
          %411 = vmatpush.msra.mxu0 0.0
          %412 = vmatpush.msra.mxu0 0.0
          %413 = vmatpush.msra.mxu0 0.0
          %414 = vmatpush.msra.mxu0 0.0
          %415 = vmatpush.msra.mxu0 0.0
          %416 = vmatpush.msra.mxu0 0.0
          %417 = vmatpush.msra.mxu0 0.0
          %418 = vmatpush.msra.mxu0 0.0
          %419 = vmatpush.msra.mxu0 0.0
          %420 = vmatpush.msra.mxu0 %v357
          %421 = vmatpush.msra.mxu0 %v355
          %422 = vmatpush.msra.mxu0 %v353
          %423 = vmatpush.msra.mxu0 %v351
          %424 = vmatmul.f32.gmra.mxu0 %v371
          %v425 = vpop.f32.mrf.mxu0
          %v426 = vadd.f32 0.0, %v425
          %427 = vmatmul.f32.gmra.mxu0 %v373
          %v428 = vpop.f32.mrf.mxu0
          %v429 = vadd.f32 0.0, %v428
          %430 = vmatmul.f32.gmra.mxu0 %v375
          %v431 = vpop.f32.mrf.mxu0
          %v432 = vadd.f32 0.0, %v431
          %433 = vmatmul.f32.gmra.mxu0 %v377
          %v434 = vpop.f32.mrf.mxu0
          %v435 = vadd.f32 0.0, %v434
          %436 = vdwg.mxu0
          %437 = vmatpush.msra.mxu0 0.0
          %438 = vmatpush.msra.mxu0 0.0
          %439 = vmatpush.msra.mxu0 0.0
          %440 = vmatpush.msra.mxu0 0.0
          %441 = vmatpush.msra.mxu0 0.0
          %442 = vmatpush.msra.mxu0 0.0
          %443 = vmatpush.msra.mxu0 0.0
          %444 = vmatpush.msra.mxu0 0.0
          %445 = vmatpush.msra.mxu0 0.0
          %446 = vmatpush.msra.mxu0 0.0
          %447 = vmatpush.msra.mxu0 0.0
          %448 = vmatpush.msra.mxu0 0.0
          %449 = vmatpush.msra.mxu0 %v348
          %450 = vmatpush.msra.mxu0 %v342
          %451 = vmatpush.msra.mxu0 %v336
          %452 = vmatpush.msra.mxu0 %v330
          %453 = vmatmul.f32.gmra.mxu0 %v371
          %v454 = vpop.f32.mrf.mxu0
          %v455 = vadd.f32 0.0, %v454
          %456 = vmatmul.f32.gmra.mxu0 %v373
          %v457 = vpop.f32.mrf.mxu0
          %v458 = vadd.f32 0.0, %v457
          %459 = vmatmul.f32.gmra.mxu0 %v375
          %v460 = vpop.f32.mrf.mxu0
          %v461 = vadd.f32 0.0, %v460
          %462 = vmatmul.f32.gmra.mxu0 %v377
          %v463 = vpop.f32.mrf.mxu0
          %v464 = vadd.f32 0.0, %v463
          %465 = vdwg.mxu0
          %v466 = vsel %vm370, %v277, 0
          %v468 = vsel %vm370, %v280, 0
          %v470 = vsel %vm370, %v283, 0
          %v472 = vsel %vm370, %v286, 0
          %474 = vmatpush.msra.mxu0 0.0
          %475 = vmatpush.msra.mxu0 0.0
          %476 = vmatpush.msra.mxu0 0.0
          %477 = vmatpush.msra.mxu0 0.0
          %478 = vmatpush.msra.mxu0 0.0
          %479 = vmatpush.msra.mxu0 0.0
          %480 = vmatpush.msra.mxu0 0.0
          %481 = vmatpush.msra.mxu0 0.0
          %482 = vmatpush.msra.mxu0 0.0
          %483 = vmatpush.msra.mxu0 0.0
          %484 = vmatpush.msra.mxu0 0.0
          %485 = vmatpush.msra.mxu0 0.0
          %486 = vmatpush.msra.mxu0 %v298
          %487 = vmatpush.msra.mxu0 %v295
          %488 = vmatpush.msra.mxu0 %v292
          %489 = vmatpush.msra.mxu0 %v289
          %490 = vmatmul.f32.gmra.mxu0 %v466
          %v491 = vpop.f32.mrf.mxu0
          %v492 = vadd.f32 %v397, %v491
          %493 = vmatmul.f32.gmra.mxu0 %v468
          %v494 = vpop.f32.mrf.mxu0
          %v495 = vadd.f32 %v400, %v494
          %496 = vmatmul.f32.gmra.mxu0 %v470
          %v497 = vpop.f32.mrf.mxu0
          %v498 = vadd.f32 %v403, %v497
          %499 = vmatmul.f32.gmra.mxu0 %v472
          %v500 = vpop.f32.mrf.mxu0
          %v501 = vadd.f32 %v406, %v500
          %502 = vdwg.mxu0
          %503 = vmatpush.msra.mxu0 0.0
          %504 = vmatpush.msra.mxu0 0.0
          %505 = vmatpush.msra.mxu0 0.0
          %506 = vmatpush.msra.mxu0 0.0
          %507 = vmatpush.msra.mxu0 0.0
          %508 = vmatpush.msra.mxu0 0.0
          %509 = vmatpush.msra.mxu0 0.0
          %510 = vmatpush.msra.mxu0 0.0
          %511 = vmatpush.msra.mxu0 0.0
          %512 = vmatpush.msra.mxu0 0.0
          %513 = vmatpush.msra.mxu0 0.0
          %514 = vmatpush.msra.mxu0 0.0
          %515 = vmatpush.msra.mxu0 %v299
          %516 = vmatpush.msra.mxu0 %v296
          %517 = vmatpush.msra.mxu0 %v293
          %518 = vmatpush.msra.mxu0 %v290
          %519 = vmatmul.f32.gmra.mxu0 %v466
          %v520 = vpop.f32.mrf.mxu0
          %v521 = vadd.f32 %v426, %v520
          %522 = vmatmul.f32.gmra.mxu0 %v468
          %v523 = vpop.f32.mrf.mxu0
          %v524 = vadd.f32 %v429, %v523
          %525 = vmatmul.f32.gmra.mxu0 %v470
          %v526 = vpop.f32.mrf.mxu0
          %v527 = vadd.f32 %v432, %v526
          %528 = vmatmul.f32.gmra.mxu0 %v472
          %v529 = vpop.f32.mrf.mxu0
          %v530 = vadd.f32 %v435, %v529
          %531 = vdwg.mxu0
          %532 = vmatpush.msra.mxu0 0.0
          %533 = vmatpush.msra.mxu0 0.0
          %534 = vmatpush.msra.mxu0 0.0
          %535 = vmatpush.msra.mxu0 0.0
          %536 = vmatpush.msra.mxu0 0.0
          %537 = vmatpush.msra.mxu0 0.0
          %538 = vmatpush.msra.mxu0 0.0
          %539 = vmatpush.msra.mxu0 0.0
          %540 = vmatpush.msra.mxu0 0.0
          %541 = vmatpush.msra.mxu0 0.0
          %542 = vmatpush.msra.mxu0 0.0
          %543 = vmatpush.msra.mxu0 0.0
          %544 = vmatpush.msra.mxu0 %v300
          %545 = vmatpush.msra.mxu0 %v297
          %546 = vmatpush.msra.mxu0 %v294
          %547 = vmatpush.msra.mxu0 %v291
          %548 = vmatmul.f32.gmra.mxu0 %v466
          %v549 = vpop.f32.mrf.mxu0
          %v550 = vadd.f32 %v455, %v549
          %551 = vmatmul.f32.gmra.mxu0 %v468
          %v552 = vpop.f32.mrf.mxu0
          %v553 = vadd.f32 %v458, %v552
          %554 = vmatmul.f32.gmra.mxu0 %v470
          %v555 = vpop.f32.mrf.mxu0
          %v556 = vadd.f32 %v461, %v555
          %557 = vmatmul.f32.gmra.mxu0 %v472
          %v558 = vpop.f32.mrf.mxu0
          %v559 = vadd.f32 %v464, %v558
          %560 = vdwg.mxu0
          %561 = vrot.lane.b32.xlu0 %v277, 64
          %v562 = vpop.permute.xlu0 %561
          %563 = vrot.lane.b32.xlu0 %v280, 64
          %v564 = vpop.permute.xlu0 %563
          %565 = vrot.lane.b32.xlu0 %v283, 64
          %v566 = vpop.permute.xlu0 %565
          %567 = vrot.lane.b32.xlu0 %v286, 64
          %v568 = vpop.permute.xlu0 %567
          %569 = vrot.lane.b32.xlu0 %v289, 126
          %v570 = vpop.permute.xlu0 %569
          %571 = vrot.lane.b32.xlu0 %v290, 126
          %v572 = vpop.permute.xlu0 %571
          %573 = vrot.lane.b32.xlu0 %v291, 126
          %v574 = vpop.permute.xlu0 %573
          %575 = vrot.lane.b32.xlu0 %v292, 126
          %v576 = vpop.permute.xlu0 %575
          %577 = vrot.lane.b32.xlu0 %v293, 126
          %v578 = vpop.permute.xlu0 %577
          %579 = vrot.lane.b32.xlu0 %v294, 126
          %v580 = vpop.permute.xlu0 %579
          %581 = vrot.lane.b32.xlu0 %v295, 126
          %v582 = vpop.permute.xlu0 %581
          %583 = vrot.lane.b32.xlu0 %v296, 126
          %v584 = vpop.permute.xlu0 %583
          %585 = vrot.lane.b32.xlu0 %v297, 126
          %v586 = vpop.permute.xlu0 %585
          %587 = vrot.lane.b32.xlu0 %v298, 126
          %v588 = vpop.permute.xlu0 %587
          %589 = vrot.lane.b32.xlu0 %v299, 126
          %v590 = vpop.permute.xlu0 %589
          %591 = vrot.lane.b32.xlu0 %v300, 126
          %v592 = vpop.permute.xlu0 %591
          %vm593 = vcmask 1031168
          %v594 = vsel %vm593, %v570, %v572
          %v595 = vsel %vm593, %v572, %v574
          %v596 = vsel %vm593, %v576, %v578
          %v597 = vsel %vm593, %v578, %v580
          %v598 = vsel %vm593, %v582, %v584
          %v599 = vsel %vm593, %v584, %v586
          %v600 = vsel %vm593, %v588, %v590
          %v601 = vsel %vm593, %v590, %v592
          %v614 = vsel %vm370, %v562, 0
          %v616 = vsel %vm370, %v564, 0
          %v618 = vsel %vm370, %v566, 0
          %v620 = vsel %vm370, %v568, 0
          %622 = vmatpush.msra.mxu0 0.0
          %623 = vmatpush.msra.mxu0 0.0
          %624 = vmatpush.msra.mxu0 0.0
          %625 = vmatpush.msra.mxu0 0.0
          %626 = vmatpush.msra.mxu0 0.0
          %627 = vmatpush.msra.mxu0 0.0
          %628 = vmatpush.msra.mxu0 0.0
          %629 = vmatpush.msra.mxu0 0.0
          %630 = vmatpush.msra.mxu0 0.0
          %631 = vmatpush.msra.mxu0 0.0
          %632 = vmatpush.msra.mxu0 0.0
          %633 = vmatpush.msra.mxu0 0.0
          %634 = vmatpush.msra.mxu0 %v600
          %635 = vmatpush.msra.mxu0 %v598
          %636 = vmatpush.msra.mxu0 %v596
          %637 = vmatpush.msra.mxu0 %v594
          %638 = vmatmul.f32.gmra.mxu0 %v614
          %v639 = vpop.f32.mrf.mxu0
          %v640 = vadd.f32 0.0, %v639
          %641 = vmatmul.f32.gmra.mxu0 %v616
          %v642 = vpop.f32.mrf.mxu0
          %v643 = vadd.f32 0.0, %v642
          %644 = vmatmul.f32.gmra.mxu0 %v618
          %v645 = vpop.f32.mrf.mxu0
          %v646 = vadd.f32 0.0, %v645
          %647 = vmatmul.f32.gmra.mxu0 %v620
          %v648 = vpop.f32.mrf.mxu0
          %v649 = vadd.f32 0.0, %v648
          %650 = vdwg.mxu0
          %651 = vmatpush.msra.mxu0 0.0
          %652 = vmatpush.msra.mxu0 0.0
          %653 = vmatpush.msra.mxu0 0.0
          %654 = vmatpush.msra.mxu0 0.0
          %655 = vmatpush.msra.mxu0 0.0
          %656 = vmatpush.msra.mxu0 0.0
          %657 = vmatpush.msra.mxu0 0.0
          %658 = vmatpush.msra.mxu0 0.0
          %659 = vmatpush.msra.mxu0 0.0
          %660 = vmatpush.msra.mxu0 0.0
          %661 = vmatpush.msra.mxu0 0.0
          %662 = vmatpush.msra.mxu0 0.0
          %663 = vmatpush.msra.mxu0 %v601
          %664 = vmatpush.msra.mxu0 %v599
          %665 = vmatpush.msra.mxu0 %v597
          %666 = vmatpush.msra.mxu0 %v595
          %667 = vmatmul.f32.gmra.mxu0 %v614
          %v668 = vpop.f32.mrf.mxu0
          %v669 = vadd.f32 0.0, %v668
          %670 = vmatmul.f32.gmra.mxu0 %v616
          %v671 = vpop.f32.mrf.mxu0
          %v672 = vadd.f32 0.0, %v671
          %673 = vmatmul.f32.gmra.mxu0 %v618
          %v674 = vpop.f32.mrf.mxu0
          %v675 = vadd.f32 0.0, %v674
          %676 = vmatmul.f32.gmra.mxu0 %v620
          %v677 = vpop.f32.mrf.mxu0
          %v678 = vadd.f32 0.0, %v677
          %679 = vdwg.mxu0
          %680 = vmatpush.msra.mxu0 0.0
          %681 = vmatpush.msra.mxu0 0.0
          %682 = vmatpush.msra.mxu0 0.0
          %683 = vmatpush.msra.mxu0 0.0
          %684 = vmatpush.msra.mxu0 0.0
          %685 = vmatpush.msra.mxu0 0.0
          %686 = vmatpush.msra.mxu0 0.0
          %687 = vmatpush.msra.mxu0 0.0
          %688 = vmatpush.msra.mxu0 0.0
          %689 = vmatpush.msra.mxu0 0.0
          %690 = vmatpush.msra.mxu0 0.0
          %691 = vmatpush.msra.mxu0 0.0
          %692 = vmatpush.msra.mxu0 %v592
          %693 = vmatpush.msra.mxu0 %v586
          %694 = vmatpush.msra.mxu0 %v580
          %695 = vmatpush.msra.mxu0 %v574
          %696 = vmatmul.f32.gmra.mxu0 %v614
          %v697 = vpop.f32.mrf.mxu0
          %v698 = vadd.f32 0.0, %v697
          %699 = vmatmul.f32.gmra.mxu0 %v616
          %v700 = vpop.f32.mrf.mxu0
          %v701 = vadd.f32 0.0, %v700
          %702 = vmatmul.f32.gmra.mxu0 %v618
          %v703 = vpop.f32.mrf.mxu0
          %v704 = vadd.f32 0.0, %v703
          %705 = vmatmul.f32.gmra.mxu0 %v620
          %v706 = vpop.f32.mrf.mxu0
          %v707 = vadd.f32 0.0, %v706
          %708 = vdwg.mxu0
          %v709 = vadd.f32 %v492, %v640
          %v710 = vadd.f32 %v521, %v669
          %v711 = vadd.f32 %v550, %v698
          %v712 = vadd.f32 %v495, %v643
          %v713 = vadd.f32 %v524, %v672
          %v714 = vadd.f32 %v553, %v701
          %v715 = vadd.f32 %v498, %v646
          %v716 = vadd.f32 %v527, %v675
          %v717 = vadd.f32 %v556, %v704
          %v718 = vadd.f32 %v501, %v649
          %v719 = vadd.f32 %v530, %v678
          %v720 = vadd.f32 %v559, %v707
          %721 = vrot.lane.b32.xlu0 %v277, 32
          %v722 = vpop.permute.xlu0 %721
          %723 = vrot.lane.b32.xlu0 %v280, 32
          %v724 = vpop.permute.xlu0 %723
          %725 = vrot.lane.b32.xlu0 %v283, 32
          %v726 = vpop.permute.xlu0 %725
          %727 = vrot.lane.b32.xlu0 %v286, 32
          %v728 = vpop.permute.xlu0 %727
          %729 = vrot.lane.b32.xlu0 %v289, 110
          %v730 = vpop.permute.xlu0 %729
          %731 = vrot.lane.b32.xlu0 %v290, 110
          %v732 = vpop.permute.xlu0 %731
          %733 = vrot.lane.b32.xlu0 %v291, 110
          %v734 = vpop.permute.xlu0 %733
          %735 = vrot.lane.b32.xlu0 %v292, 110
          %v736 = vpop.permute.xlu0 %735
          %737 = vrot.lane.b32.xlu0 %v293, 110
          %v738 = vpop.permute.xlu0 %737
          %739 = vrot.lane.b32.xlu0 %v294, 110
          %v740 = vpop.permute.xlu0 %739
          %741 = vrot.lane.b32.xlu0 %v295, 110
          %v742 = vpop.permute.xlu0 %741
          %743 = vrot.lane.b32.xlu0 %v296, 110
          %v744 = vpop.permute.xlu0 %743
          %745 = vrot.lane.b32.xlu0 %v297, 110
          %v746 = vpop.permute.xlu0 %745
          %747 = vrot.lane.b32.xlu0 %v298, 110
          %v748 = vpop.permute.xlu0 %747
          %749 = vrot.lane.b32.xlu0 %v299, 110
          %v750 = vpop.permute.xlu0 %749
          %751 = vrot.lane.b32.xlu0 %v300, 110
          %v752 = vpop.permute.xlu0 %751
          %vm753 = vcmask 900096
          %v754 = vsel %vm753, %v730, %v732
          %v755 = vsel %vm753, %v732, %v734
          %v756 = vsel %vm753, %v736, %v738
          %v757 = vsel %vm753, %v738, %v740
          %v758 = vsel %vm753, %v742, %v744
          %v759 = vsel %vm753, %v744, %v746
          %v760 = vsel %vm753, %v748, %v750
          %v761 = vsel %vm753, %v750, %v752
          %v774 = vsel %vm370, %v722, 0
          %v776 = vsel %vm370, %v724, 0
          %v778 = vsel %vm370, %v726, 0
          %v780 = vsel %vm370, %v728, 0
          %782 = vmatpush.msra.mxu0 0.0
          %783 = vmatpush.msra.mxu0 0.0
          %784 = vmatpush.msra.mxu0 0.0
          %785 = vmatpush.msra.mxu0 0.0
          %786 = vmatpush.msra.mxu0 0.0
          %787 = vmatpush.msra.mxu0 0.0
          %788 = vmatpush.msra.mxu0 0.0
          %789 = vmatpush.msra.mxu0 0.0
          %790 = vmatpush.msra.mxu0 0.0
          %791 = vmatpush.msra.mxu0 0.0
          %792 = vmatpush.msra.mxu0 0.0
          %793 = vmatpush.msra.mxu0 0.0
          %794 = vmatpush.msra.mxu0 %v760
          %795 = vmatpush.msra.mxu0 %v758
          %796 = vmatpush.msra.mxu0 %v756
          %797 = vmatpush.msra.mxu0 %v754
          %798 = vmatmul.f32.gmra.mxu0 %v774
          %v799 = vpop.f32.mrf.mxu0
          %v800 = vadd.f32 0.0, %v799
          %801 = vmatmul.f32.gmra.mxu0 %v776
          %v802 = vpop.f32.mrf.mxu0
          %v803 = vadd.f32 0.0, %v802
          %804 = vmatmul.f32.gmra.mxu0 %v778
          %v805 = vpop.f32.mrf.mxu0
          %v806 = vadd.f32 0.0, %v805
          %807 = vmatmul.f32.gmra.mxu0 %v780
          %v808 = vpop.f32.mrf.mxu0
          %v809 = vadd.f32 0.0, %v808
          %810 = vdwg.mxu0
          %811 = vmatpush.msra.mxu0 0.0
          %812 = vmatpush.msra.mxu0 0.0
          %813 = vmatpush.msra.mxu0 0.0
          %814 = vmatpush.msra.mxu0 0.0
          %815 = vmatpush.msra.mxu0 0.0
          %816 = vmatpush.msra.mxu0 0.0
          %817 = vmatpush.msra.mxu0 0.0
          %818 = vmatpush.msra.mxu0 0.0
          %819 = vmatpush.msra.mxu0 0.0
          %820 = vmatpush.msra.mxu0 0.0
          %821 = vmatpush.msra.mxu0 0.0
          %822 = vmatpush.msra.mxu0 0.0
          %823 = vmatpush.msra.mxu0 %v761
          %824 = vmatpush.msra.mxu0 %v759
          %825 = vmatpush.msra.mxu0 %v757
          %826 = vmatpush.msra.mxu0 %v755
          %827 = vmatmul.f32.gmra.mxu0 %v774
          %v828 = vpop.f32.mrf.mxu0
          %v829 = vadd.f32 0.0, %v828
          %830 = vmatmul.f32.gmra.mxu0 %v776
          %v831 = vpop.f32.mrf.mxu0
          %v832 = vadd.f32 0.0, %v831
          %833 = vmatmul.f32.gmra.mxu0 %v778
          %v834 = vpop.f32.mrf.mxu0
          %v835 = vadd.f32 0.0, %v834
          %836 = vmatmul.f32.gmra.mxu0 %v780
          %v837 = vpop.f32.mrf.mxu0
          %v838 = vadd.f32 0.0, %v837
          %839 = vdwg.mxu0
          %840 = vmatpush.msra.mxu0 0.0
          %841 = vmatpush.msra.mxu0 0.0
          %842 = vmatpush.msra.mxu0 0.0
          %843 = vmatpush.msra.mxu0 0.0
          %844 = vmatpush.msra.mxu0 0.0
          %845 = vmatpush.msra.mxu0 0.0
          %846 = vmatpush.msra.mxu0 0.0
          %847 = vmatpush.msra.mxu0 0.0
          %848 = vmatpush.msra.mxu0 0.0
          %849 = vmatpush.msra.mxu0 0.0
          %850 = vmatpush.msra.mxu0 0.0
          %851 = vmatpush.msra.mxu0 0.0
          %852 = vmatpush.msra.mxu0 %v752
          %853 = vmatpush.msra.mxu0 %v746
          %854 = vmatpush.msra.mxu0 %v740
          %855 = vmatpush.msra.mxu0 %v734
          %856 = vmatmul.f32.gmra.mxu0 %v774
          %v857 = vpop.f32.mrf.mxu0
          %v858 = vadd.f32 0.0, %v857
          %859 = vmatmul.f32.gmra.mxu0 %v776
          %v860 = vpop.f32.mrf.mxu0
          %v861 = vadd.f32 0.0, %v860
          %862 = vmatmul.f32.gmra.mxu0 %v778
          %v863 = vpop.f32.mrf.mxu0
          %v864 = vadd.f32 0.0, %v863
          %865 = vmatmul.f32.gmra.mxu0 %v780
          %v866 = vpop.f32.mrf.mxu0
          %v867 = vadd.f32 0.0, %v866
          %868 = vdwg.mxu0
          %v869 = vadd.f32 %v709, %v800
          %v870 = vadd.f32 %v710, %v829
          %v871 = vadd.f32 %v711, %v858
          %v872 = vadd.f32 %v712, %v803
          %v873 = vadd.f32 %v713, %v832
          %v874 = vadd.f32 %v714, %v861
          %v875 = vadd.f32 %v715, %v806
          %v876 = vadd.f32 %v716, %v835
          %v877 = vadd.f32 %v717, %v864
          %v878 = vadd.f32 %v718, %v809
          %v879 = vadd.f32 %v719, %v838
          %v880 = vadd.f32 %v720, %v867
          %881 = vrot.lane.b32.xlu0 %v289, 109
          %v882 = vpop.permute.xlu0 %881
          %883 = vrot.lane.b32.xlu0 %v290, 109
          %v884 = vpop.permute.xlu0 %883
          %885 = vrot.lane.b32.xlu0 %v291, 109
          %v886 = vpop.permute.xlu0 %885
          %887 = vrot.lane.b32.xlu0 %v292, 109
          %v888 = vpop.permute.xlu0 %887
          %889 = vrot.lane.b32.xlu0 %v293, 109
          %v890 = vpop.permute.xlu0 %889
          %891 = vrot.lane.b32.xlu0 %v294, 109
          %v892 = vpop.permute.xlu0 %891
          %893 = vrot.lane.b32.xlu0 %v295, 109
          %v894 = vpop.permute.xlu0 %893
          %895 = vrot.lane.b32.xlu0 %v296, 109
          %v896 = vpop.permute.xlu0 %895
          %897 = vrot.lane.b32.xlu0 %v297, 109
          %v898 = vpop.permute.xlu0 %897
          %899 = vrot.lane.b32.xlu0 %v298, 109
          %v900 = vpop.permute.xlu0 %899
          %901 = vrot.lane.b32.xlu0 %v299, 109
          %v902 = vpop.permute.xlu0 %901
          %903 = vrot.lane.b32.xlu0 %v300, 109
          %v904 = vpop.permute.xlu0 %903
          %vm905 = vcmask 891904
          %v906 = vsel %vm905, %v882, %v884
          %v907 = vsel %vm905, %v884, %v886
          %v908 = vsel %vm905, %v888, %v890
          %v909 = vsel %vm905, %v890, %v892
          %v910 = vsel %vm905, %v894, %v896
          %v911 = vsel %vm905, %v896, %v898
          %v912 = vsel %vm905, %v900, %v902
          %v913 = vsel %vm905, %v902, %v904
          %v927 = vsel %vm370, %v278, 0
          %v930 = vsel %vm370, %v281, 0
          %v933 = vsel %vm370, %v284, 0
          %v936 = vsel %vm370, %v287, 0
          %938 = vmatpush.msra.mxu0 0.0
          %939 = vmatpush.msra.mxu0 0.0
          %940 = vmatpush.msra.mxu0 0.0
          %941 = vmatpush.msra.mxu0 0.0
          %942 = vmatpush.msra.mxu0 0.0
          %943 = vmatpush.msra.mxu0 0.0
          %944 = vmatpush.msra.mxu0 0.0
          %945 = vmatpush.msra.mxu0 0.0
          %946 = vmatpush.msra.mxu0 0.0
          %947 = vmatpush.msra.mxu0 0.0
          %948 = vmatpush.msra.mxu0 0.0
          %949 = vmatpush.msra.mxu0 0.0
          %950 = vmatpush.msra.mxu0 %v912
          %951 = vmatpush.msra.mxu0 %v910
          %952 = vmatpush.msra.mxu0 %v908
          %953 = vmatpush.msra.mxu0 %v906
          %954 = vmatmul.f32.gmra.mxu0 %v927
          %v955 = vpop.f32.mrf.mxu0
          %v956 = vadd.f32 0.0, %v955
          %957 = vmatmul.f32.gmra.mxu0 %v930
          %v958 = vpop.f32.mrf.mxu0
          %v959 = vadd.f32 0.0, %v958
          %960 = vmatmul.f32.gmra.mxu0 %v933
          %v961 = vpop.f32.mrf.mxu0
          %v962 = vadd.f32 0.0, %v961
          %963 = vmatmul.f32.gmra.mxu0 %v936
          %v964 = vpop.f32.mrf.mxu0
          %v965 = vadd.f32 0.0, %v964
          %966 = vdwg.mxu0
          %967 = vmatpush.msra.mxu0 0.0
          %968 = vmatpush.msra.mxu0 0.0
          %969 = vmatpush.msra.mxu0 0.0
          %970 = vmatpush.msra.mxu0 0.0
          %971 = vmatpush.msra.mxu0 0.0
          %972 = vmatpush.msra.mxu0 0.0
          %973 = vmatpush.msra.mxu0 0.0
          %974 = vmatpush.msra.mxu0 0.0
          %975 = vmatpush.msra.mxu0 0.0
          %976 = vmatpush.msra.mxu0 0.0
          %977 = vmatpush.msra.mxu0 0.0
          %978 = vmatpush.msra.mxu0 0.0
          %979 = vmatpush.msra.mxu0 %v913
          %980 = vmatpush.msra.mxu0 %v911
          %981 = vmatpush.msra.mxu0 %v909
          %982 = vmatpush.msra.mxu0 %v907
          %983 = vmatmul.f32.gmra.mxu0 %v927
          %v984 = vpop.f32.mrf.mxu0
          %v985 = vadd.f32 0.0, %v984
          %986 = vmatmul.f32.gmra.mxu0 %v930
          %v987 = vpop.f32.mrf.mxu0
          %v988 = vadd.f32 0.0, %v987
          %989 = vmatmul.f32.gmra.mxu0 %v933
          %v990 = vpop.f32.mrf.mxu0
          %v991 = vadd.f32 0.0, %v990
          %992 = vmatmul.f32.gmra.mxu0 %v936
          %v993 = vpop.f32.mrf.mxu0
          %v994 = vadd.f32 0.0, %v993
          %995 = vdwg.mxu0
          %996 = vmatpush.msra.mxu0 0.0
          %997 = vmatpush.msra.mxu0 0.0
          %998 = vmatpush.msra.mxu0 0.0
          %999 = vmatpush.msra.mxu0 0.0
          %1000 = vmatpush.msra.mxu0 0.0
          %1001 = vmatpush.msra.mxu0 0.0
          %1002 = vmatpush.msra.mxu0 0.0
          %1003 = vmatpush.msra.mxu0 0.0
          %1004 = vmatpush.msra.mxu0 0.0
          %1005 = vmatpush.msra.mxu0 0.0
          %1006 = vmatpush.msra.mxu0 0.0
          %1007 = vmatpush.msra.mxu0 0.0
          %1008 = vmatpush.msra.mxu0 %v904
          %1009 = vmatpush.msra.mxu0 %v898
          %1010 = vmatpush.msra.mxu0 %v892
          %1011 = vmatpush.msra.mxu0 %v886
          %1012 = vmatmul.f32.gmra.mxu0 %v927
          %v1013 = vpop.f32.mrf.mxu0
          %v1014 = vadd.f32 0.0, %v1013
          %1015 = vmatmul.f32.gmra.mxu0 %v930
          %v1016 = vpop.f32.mrf.mxu0
          %v1017 = vadd.f32 0.0, %v1016
          %1018 = vmatmul.f32.gmra.mxu0 %v933
          %v1019 = vpop.f32.mrf.mxu0
          %v1020 = vadd.f32 0.0, %v1019
          %1021 = vmatmul.f32.gmra.mxu0 %v936
          %v1022 = vpop.f32.mrf.mxu0
          %v1023 = vadd.f32 0.0, %v1022
          %1024 = vdwg.mxu0
          %v1025 = vadd.f32 %v869, %v956
          %v1026 = vadd.f32 %v870, %v985
          %v1027 = vadd.f32 %v871, %v1014
          %v1028 = vadd.f32 %v872, %v959
          %v1029 = vadd.f32 %v873, %v988
          %v1030 = vadd.f32 %v874, %v1017
          %v1031 = vadd.f32 %v875, %v962
          %v1032 = vadd.f32 %v876, %v991
          %v1033 = vadd.f32 %v877, %v1020
          %v1034 = vadd.f32 %v878, %v965
          %v1035 = vadd.f32 %v879, %v994
          %v1036 = vadd.f32 %v880, %v1023
          %1037 = vrot.lane.b32.xlu0 %v278, 96
          %v1038 = vpop.permute.xlu0 %1037
          %1039 = vrot.lane.b32.xlu0 %v281, 96
          %v1040 = vpop.permute.xlu0 %1039
          %1041 = vrot.lane.b32.xlu0 %v284, 96
          %v1042 = vpop.permute.xlu0 %1041
          %1043 = vrot.lane.b32.xlu0 %v287, 96
          %v1044 = vpop.permute.xlu0 %1043
          %1045 = vrot.lane.b32.xlu0 %v289, 108
          %v1046 = vpop.permute.xlu0 %1045
          %1047 = vrot.lane.b32.xlu0 %v290, 108
          %v1048 = vpop.permute.xlu0 %1047
          %1049 = vrot.lane.b32.xlu0 %v291, 108
          %v1050 = vpop.permute.xlu0 %1049
          %1051 = vrot.lane.b32.xlu0 %v292, 108
          %v1052 = vpop.permute.xlu0 %1051
          %1053 = vrot.lane.b32.xlu0 %v293, 108
          %v1054 = vpop.permute.xlu0 %1053
          %1055 = vrot.lane.b32.xlu0 %v294, 108
          %v1056 = vpop.permute.xlu0 %1055
          %1057 = vrot.lane.b32.xlu0 %v295, 108
          %v1058 = vpop.permute.xlu0 %1057
          %1059 = vrot.lane.b32.xlu0 %v296, 108
          %v1060 = vpop.permute.xlu0 %1059
          %1061 = vrot.lane.b32.xlu0 %v297, 108
          %v1062 = vpop.permute.xlu0 %1061
          %1063 = vrot.lane.b32.xlu0 %v298, 108
          %v1064 = vpop.permute.xlu0 %1063
          %1065 = vrot.lane.b32.xlu0 %v299, 108
          %v1066 = vpop.permute.xlu0 %1065
          %1067 = vrot.lane.b32.xlu0 %v300, 108
          %v1068 = vpop.permute.xlu0 %1067
          %vm1069 = vcmask 883712
          %v1070 = vsel %vm1069, %v1046, %v1048
          %v1071 = vsel %vm1069, %v1048, %v1050
          %v1072 = vsel %vm1069, %v1052, %v1054
          %v1073 = vsel %vm1069, %v1054, %v1056
          %v1074 = vsel %vm1069, %v1058, %v1060
          %v1075 = vsel %vm1069, %v1060, %v1062
          %v1076 = vsel %vm1069, %v1064, %v1066
          %v1077 = vsel %vm1069, %v1066, %v1068
          %v1090 = vsel %vm370, %v1038, 0
          %v1092 = vsel %vm370, %v1040, 0
          %v1094 = vsel %vm370, %v1042, 0
          %v1096 = vsel %vm370, %v1044, 0
          %1098 = vmatpush.msra.mxu0 0.0
          %1099 = vmatpush.msra.mxu0 0.0
          %1100 = vmatpush.msra.mxu0 0.0
          %1101 = vmatpush.msra.mxu0 0.0
          %1102 = vmatpush.msra.mxu0 0.0
          %1103 = vmatpush.msra.mxu0 0.0
          %1104 = vmatpush.msra.mxu0 0.0
          %1105 = vmatpush.msra.mxu0 0.0
          %1106 = vmatpush.msra.mxu0 0.0
          %1107 = vmatpush.msra.mxu0 0.0
          %1108 = vmatpush.msra.mxu0 0.0
          %1109 = vmatpush.msra.mxu0 0.0
          %1110 = vmatpush.msra.mxu0 %v1076
          %1111 = vmatpush.msra.mxu0 %v1074
          %1112 = vmatpush.msra.mxu0 %v1072
          %1113 = vmatpush.msra.mxu0 %v1070
          %1114 = vmatmul.f32.gmra.mxu0 %v1090
          %v1115 = vpop.f32.mrf.mxu0
          %v1116 = vadd.f32 0.0, %v1115
          %1117 = vmatmul.f32.gmra.mxu0 %v1092
          %v1118 = vpop.f32.mrf.mxu0
          %v1119 = vadd.f32 0.0, %v1118
          %1120 = vmatmul.f32.gmra.mxu0 %v1094
          %v1121 = vpop.f32.mrf.mxu0
          %v1122 = vadd.f32 0.0, %v1121
          %1123 = vmatmul.f32.gmra.mxu0 %v1096
          %v1124 = vpop.f32.mrf.mxu0
          %v1125 = vadd.f32 0.0, %v1124
          %1126 = vdwg.mxu0
          %1127 = vmatpush.msra.mxu0 0.0
          %1128 = vmatpush.msra.mxu0 0.0
          %1129 = vmatpush.msra.mxu0 0.0
          %1130 = vmatpush.msra.mxu0 0.0
          %1131 = vmatpush.msra.mxu0 0.0
          %1132 = vmatpush.msra.mxu0 0.0
          %1133 = vmatpush.msra.mxu0 0.0
          %1134 = vmatpush.msra.mxu0 0.0
          %1135 = vmatpush.msra.mxu0 0.0
          %1136 = vmatpush.msra.mxu0 0.0
          %1137 = vmatpush.msra.mxu0 0.0
          %1138 = vmatpush.msra.mxu0 0.0
          %1139 = vmatpush.msra.mxu0 %v1077
          %1140 = vmatpush.msra.mxu0 %v1075
          %1141 = vmatpush.msra.mxu0 %v1073
          %1142 = vmatpush.msra.mxu0 %v1071
          %1143 = vmatmul.f32.gmra.mxu0 %v1090
          %v1144 = vpop.f32.mrf.mxu0
          %v1145 = vadd.f32 0.0, %v1144
          %1146 = vmatmul.f32.gmra.mxu0 %v1092
          %v1147 = vpop.f32.mrf.mxu0
          %v1148 = vadd.f32 0.0, %v1147
          %1149 = vmatmul.f32.gmra.mxu0 %v1094
          %v1150 = vpop.f32.mrf.mxu0
          %v1151 = vadd.f32 0.0, %v1150
          %1152 = vmatmul.f32.gmra.mxu0 %v1096
          %v1153 = vpop.f32.mrf.mxu0
          %v1154 = vadd.f32 0.0, %v1153
          %1155 = vdwg.mxu0
          %1156 = vmatpush.msra.mxu0 0.0
          %1157 = vmatpush.msra.mxu0 0.0
          %1158 = vmatpush.msra.mxu0 0.0
          %1159 = vmatpush.msra.mxu0 0.0
          %1160 = vmatpush.msra.mxu0 0.0
          %1161 = vmatpush.msra.mxu0 0.0
          %1162 = vmatpush.msra.mxu0 0.0
          %1163 = vmatpush.msra.mxu0 0.0
          %1164 = vmatpush.msra.mxu0 0.0
          %1165 = vmatpush.msra.mxu0 0.0
          %1166 = vmatpush.msra.mxu0 0.0
          %1167 = vmatpush.msra.mxu0 0.0
          %1168 = vmatpush.msra.mxu0 %v1068
          %1169 = vmatpush.msra.mxu0 %v1062
          %1170 = vmatpush.msra.mxu0 %v1056
          %1171 = vmatpush.msra.mxu0 %v1050
          %1172 = vmatmul.f32.gmra.mxu0 %v1090
          %v1173 = vpop.f32.mrf.mxu0
          %v1174 = vadd.f32 0.0, %v1173
          %1175 = vmatmul.f32.gmra.mxu0 %v1092
          %v1176 = vpop.f32.mrf.mxu0
          %v1177 = vadd.f32 0.0, %v1176
          %1178 = vmatmul.f32.gmra.mxu0 %v1094
          %v1179 = vpop.f32.mrf.mxu0
          %v1180 = vadd.f32 0.0, %v1179
          %1181 = vmatmul.f32.gmra.mxu0 %v1096
          %v1182 = vpop.f32.mrf.mxu0
          %v1183 = vadd.f32 0.0, %v1182
          %1184 = vdwg.mxu0
          %v1185 = vadd.f32 %v1025, %v1116
          %v1186 = vadd.f32 %v1026, %v1145
          %v1187 = vadd.f32 %v1027, %v1174
          %v1188 = vadd.f32 %v1028, %v1119
          %v1189 = vadd.f32 %v1029, %v1148
          %v1190 = vadd.f32 %v1030, %v1177
          %v1191 = vadd.f32 %v1031, %v1122
          %v1192 = vadd.f32 %v1032, %v1151
          %v1193 = vadd.f32 %v1033, %v1180
          %v1194 = vadd.f32 %v1034, %v1125
          %v1195 = vadd.f32 %v1035, %v1154
          %v1196 = vadd.f32 %v1036, %v1183
          %1197 = vrot.lane.b32.xlu0 %v278, 64
          %v1198 = vpop.permute.xlu0 %1197
          %1199 = vrot.lane.b32.xlu0 %v281, 64
          %v1200 = vpop.permute.xlu0 %1199
          %1201 = vrot.lane.b32.xlu0 %v284, 64
          %v1202 = vpop.permute.xlu0 %1201
          %1203 = vrot.lane.b32.xlu0 %v287, 64
          %v1204 = vpop.permute.xlu0 %1203
          %1205 = vrot.lane.b32.xlu0 %v289, 92
          %v1206 = vpop.permute.xlu0 %1205
          %1207 = vrot.lane.b32.xlu0 %v290, 92
          %v1208 = vpop.permute.xlu0 %1207
          %1209 = vrot.lane.b32.xlu0 %v291, 92
          %v1210 = vpop.permute.xlu0 %1209
          %1211 = vrot.lane.b32.xlu0 %v292, 92
          %v1212 = vpop.permute.xlu0 %1211
          %1213 = vrot.lane.b32.xlu0 %v293, 92
          %v1214 = vpop.permute.xlu0 %1213
          %1215 = vrot.lane.b32.xlu0 %v294, 92
          %v1216 = vpop.permute.xlu0 %1215
          %1217 = vrot.lane.b32.xlu0 %v295, 92
          %v1218 = vpop.permute.xlu0 %1217
          %1219 = vrot.lane.b32.xlu0 %v296, 92
          %v1220 = vpop.permute.xlu0 %1219
          %1221 = vrot.lane.b32.xlu0 %v297, 92
          %v1222 = vpop.permute.xlu0 %1221
          %1223 = vrot.lane.b32.xlu0 %v298, 92
          %v1224 = vpop.permute.xlu0 %1223
          %1225 = vrot.lane.b32.xlu0 %v299, 92
          %v1226 = vpop.permute.xlu0 %1225
          %1227 = vrot.lane.b32.xlu0 %v300, 92
          %v1228 = vpop.permute.xlu0 %1227
          %vm1229 = vcmask 752640
          %v1230 = vsel %vm1229, %v1206, %v1208
          %v1231 = vsel %vm1229, %v1208, %v1210
          %v1232 = vsel %vm1229, %v1212, %v1214
          %v1233 = vsel %vm1229, %v1214, %v1216
          %v1234 = vsel %vm1229, %v1218, %v1220
          %v1235 = vsel %vm1229, %v1220, %v1222
          %v1236 = vsel %vm1229, %v1224, %v1226
          %v1237 = vsel %vm1229, %v1226, %v1228
          %v1250 = vsel %vm370, %v1198, 0
          %v1252 = vsel %vm370, %v1200, 0
          %v1254 = vsel %vm370, %v1202, 0
          %v1256 = vsel %vm370, %v1204, 0
          %1258 = vmatpush.msra.mxu0 0.0
          %1259 = vmatpush.msra.mxu0 0.0
          %1260 = vmatpush.msra.mxu0 0.0
          %1261 = vmatpush.msra.mxu0 0.0
          %1262 = vmatpush.msra.mxu0 0.0
          %1263 = vmatpush.msra.mxu0 0.0
          %1264 = vmatpush.msra.mxu0 0.0
          %1265 = vmatpush.msra.mxu0 0.0
          %1266 = vmatpush.msra.mxu0 0.0
          %1267 = vmatpush.msra.mxu0 0.0
          %1268 = vmatpush.msra.mxu0 0.0
          %1269 = vmatpush.msra.mxu0 0.0
          %1270 = vmatpush.msra.mxu0 %v1236
          %1271 = vmatpush.msra.mxu0 %v1234
          %1272 = vmatpush.msra.mxu0 %v1232
          %1273 = vmatpush.msra.mxu0 %v1230
          %1274 = vmatmul.f32.gmra.mxu0 %v1250
          %v1275 = vpop.f32.mrf.mxu0
          %v1276 = vadd.f32 0.0, %v1275
          %1277 = vmatmul.f32.gmra.mxu0 %v1252
          %v1278 = vpop.f32.mrf.mxu0
          %v1279 = vadd.f32 0.0, %v1278
          %1280 = vmatmul.f32.gmra.mxu0 %v1254
          %v1281 = vpop.f32.mrf.mxu0
          %v1282 = vadd.f32 0.0, %v1281
          %1283 = vmatmul.f32.gmra.mxu0 %v1256
          %v1284 = vpop.f32.mrf.mxu0
          %v1285 = vadd.f32 0.0, %v1284
          %1286 = vdwg.mxu0
          %1287 = vmatpush.msra.mxu0 0.0
          %1288 = vmatpush.msra.mxu0 0.0
          %1289 = vmatpush.msra.mxu0 0.0
          %1290 = vmatpush.msra.mxu0 0.0
          %1291 = vmatpush.msra.mxu0 0.0
          %1292 = vmatpush.msra.mxu0 0.0
          %1293 = vmatpush.msra.mxu0 0.0
          %1294 = vmatpush.msra.mxu0 0.0
          %1295 = vmatpush.msra.mxu0 0.0
          %1296 = vmatpush.msra.mxu0 0.0
          %1297 = vmatpush.msra.mxu0 0.0
          %1298 = vmatpush.msra.mxu0 0.0
          %1299 = vmatpush.msra.mxu0 %v1237
          %1300 = vmatpush.msra.mxu0 %v1235
          %1301 = vmatpush.msra.mxu0 %v1233
          %1302 = vmatpush.msra.mxu0 %v1231
          %1303 = vmatmul.f32.gmra.mxu0 %v1250
          %v1304 = vpop.f32.mrf.mxu0
          %v1305 = vadd.f32 0.0, %v1304
          %1306 = vmatmul.f32.gmra.mxu0 %v1252
          %v1307 = vpop.f32.mrf.mxu0
          %v1308 = vadd.f32 0.0, %v1307
          %1309 = vmatmul.f32.gmra.mxu0 %v1254
          %v1310 = vpop.f32.mrf.mxu0
          %v1311 = vadd.f32 0.0, %v1310
          %1312 = vmatmul.f32.gmra.mxu0 %v1256
          %v1313 = vpop.f32.mrf.mxu0
          %v1314 = vadd.f32 0.0, %v1313
          %1315 = vdwg.mxu0
          %1316 = vmatpush.msra.mxu0 0.0
          %1317 = vmatpush.msra.mxu0 0.0
          %1318 = vmatpush.msra.mxu0 0.0
          %1319 = vmatpush.msra.mxu0 0.0
          %1320 = vmatpush.msra.mxu0 0.0
          %1321 = vmatpush.msra.mxu0 0.0
          %1322 = vmatpush.msra.mxu0 0.0
          %1323 = vmatpush.msra.mxu0 0.0
          %1324 = vmatpush.msra.mxu0 0.0
          %1325 = vmatpush.msra.mxu0 0.0
          %1326 = vmatpush.msra.mxu0 0.0
          %1327 = vmatpush.msra.mxu0 0.0
          %1328 = vmatpush.msra.mxu0 %v1228
          %1329 = vmatpush.msra.mxu0 %v1222
          %1330 = vmatpush.msra.mxu0 %v1216
          %1331 = vmatpush.msra.mxu0 %v1210
          %1332 = vmatmul.f32.gmra.mxu0 %v1250
          %v1333 = vpop.f32.mrf.mxu0
          %v1334 = vadd.f32 0.0, %v1333
          %1335 = vmatmul.f32.gmra.mxu0 %v1252
          %v1336 = vpop.f32.mrf.mxu0
          %v1337 = vadd.f32 0.0, %v1336
          %1338 = vmatmul.f32.gmra.mxu0 %v1254
          %v1339 = vpop.f32.mrf.mxu0
          %v1340 = vadd.f32 0.0, %v1339
          %1341 = vmatmul.f32.gmra.mxu0 %v1256
          %v1342 = vpop.f32.mrf.mxu0
          %v1343 = vadd.f32 0.0, %v1342
          %1344 = vdwg.mxu0
          %v1345 = vadd.f32 %v1185, %v1276
          %v1346 = vadd.f32 %v1186, %v1305
          %v1347 = vadd.f32 %v1187, %v1334
          %v1348 = vadd.f32 %v1188, %v1279
          %v1349 = vadd.f32 %v1189, %v1308
          %v1350 = vadd.f32 %v1190, %v1337
          %v1351 = vadd.f32 %v1191, %v1282
          %v1352 = vadd.f32 %v1192, %v1311
          %v1353 = vadd.f32 %v1193, %v1340
          %v1354 = vadd.f32 %v1194, %v1285
          %v1355 = vadd.f32 %v1195, %v1314
          %v1356 = vadd.f32 %v1196, %v1343
          %1357 = vrot.lane.b32.xlu0 %v278, 32
          %v1358 = vpop.permute.xlu0 %1357
          %1359 = vrot.lane.b32.xlu0 %v281, 32
          %v1360 = vpop.permute.xlu0 %1359
          %1361 = vrot.lane.b32.xlu0 %v284, 32
          %v1362 = vpop.permute.xlu0 %1361
          %1363 = vrot.lane.b32.xlu0 %v287, 32
          %v1364 = vpop.permute.xlu0 %1363
          %1365 = vrot.lane.b32.xlu0 %v289, 91
          %v1366 = vpop.permute.xlu0 %1365
          %1367 = vrot.lane.b32.xlu0 %v290, 91
          %v1368 = vpop.permute.xlu0 %1367
          %1369 = vrot.lane.b32.xlu0 %v291, 91
          %v1370 = vpop.permute.xlu0 %1369
          %1371 = vrot.lane.b32.xlu0 %v292, 91
          %v1372 = vpop.permute.xlu0 %1371
          %1373 = vrot.lane.b32.xlu0 %v293, 91
          %v1374 = vpop.permute.xlu0 %1373
          %1375 = vrot.lane.b32.xlu0 %v294, 91
          %v1376 = vpop.permute.xlu0 %1375
          %1377 = vrot.lane.b32.xlu0 %v295, 91
          %v1378 = vpop.permute.xlu0 %1377
          %1379 = vrot.lane.b32.xlu0 %v296, 91
          %v1380 = vpop.permute.xlu0 %1379
          %1381 = vrot.lane.b32.xlu0 %v297, 91
          %v1382 = vpop.permute.xlu0 %1381
          %1383 = vrot.lane.b32.xlu0 %v298, 91
          %v1384 = vpop.permute.xlu0 %1383
          %1385 = vrot.lane.b32.xlu0 %v299, 91
          %v1386 = vpop.permute.xlu0 %1385
          %1387 = vrot.lane.b32.xlu0 %v300, 91
          %v1388 = vpop.permute.xlu0 %1387
          %vm1389 = vcmask 744448
          %v1390 = vsel %vm1389, %v1366, %v1368
          %v1391 = vsel %vm1389, %v1368, %v1370
          %v1392 = vsel %vm1389, %v1372, %v1374
          %v1393 = vsel %vm1389, %v1374, %v1376
          %v1394 = vsel %vm1389, %v1378, %v1380
          %v1395 = vsel %vm1389, %v1380, %v1382
          %v1396 = vsel %vm1389, %v1384, %v1386
          %v1397 = vsel %vm1389, %v1386, %v1388
          %v1410 = vsel %vm370, %v1358, 0
          %v1412 = vsel %vm370, %v1360, 0
          %v1414 = vsel %vm370, %v1362, 0
          %v1416 = vsel %vm370, %v1364, 0
          %1418 = vmatpush.msra.mxu0 0.0
          %1419 = vmatpush.msra.mxu0 0.0
          %1420 = vmatpush.msra.mxu0 0.0
          %1421 = vmatpush.msra.mxu0 0.0
          %1422 = vmatpush.msra.mxu0 0.0
          %1423 = vmatpush.msra.mxu0 0.0
          %1424 = vmatpush.msra.mxu0 0.0
          %1425 = vmatpush.msra.mxu0 0.0
          %1426 = vmatpush.msra.mxu0 0.0
          %1427 = vmatpush.msra.mxu0 0.0
          %1428 = vmatpush.msra.mxu0 0.0
          %1429 = vmatpush.msra.mxu0 0.0
          %1430 = vmatpush.msra.mxu0 %v1396
          %1431 = vmatpush.msra.mxu0 %v1394
          %1432 = vmatpush.msra.mxu0 %v1392
          %1433 = vmatpush.msra.mxu0 %v1390
          %1434 = vmatmul.f32.gmra.mxu0 %v1410
          %v1435 = vpop.f32.mrf.mxu0
          %v1436 = vadd.f32 0.0, %v1435
          %1437 = vmatmul.f32.gmra.mxu0 %v1412
          %v1438 = vpop.f32.mrf.mxu0
          %v1439 = vadd.f32 0.0, %v1438
          %1440 = vmatmul.f32.gmra.mxu0 %v1414
          %v1441 = vpop.f32.mrf.mxu0
          %v1442 = vadd.f32 0.0, %v1441
          %1443 = vmatmul.f32.gmra.mxu0 %v1416
          %v1444 = vpop.f32.mrf.mxu0
          %v1445 = vadd.f32 0.0, %v1444
          %1446 = vdwg.mxu0
          %1447 = vmatpush.msra.mxu0 0.0
          %1448 = vmatpush.msra.mxu0 0.0
          %1449 = vmatpush.msra.mxu0 0.0
          %1450 = vmatpush.msra.mxu0 0.0
          %1451 = vmatpush.msra.mxu0 0.0
          %1452 = vmatpush.msra.mxu0 0.0
          %1453 = vmatpush.msra.mxu0 0.0
          %1454 = vmatpush.msra.mxu0 0.0
          %1455 = vmatpush.msra.mxu0 0.0
          %1456 = vmatpush.msra.mxu0 0.0
          %1457 = vmatpush.msra.mxu0 0.0
          %1458 = vmatpush.msra.mxu0 0.0
          %1459 = vmatpush.msra.mxu0 %v1397
          %1460 = vmatpush.msra.mxu0 %v1395
          %1461 = vmatpush.msra.mxu0 %v1393
          %1462 = vmatpush.msra.mxu0 %v1391
          %1463 = vmatmul.f32.gmra.mxu0 %v1410
          %v1464 = vpop.f32.mrf.mxu0
          %v1465 = vadd.f32 0.0, %v1464
          %1466 = vmatmul.f32.gmra.mxu0 %v1412
          %v1467 = vpop.f32.mrf.mxu0
          %v1468 = vadd.f32 0.0, %v1467
          %1469 = vmatmul.f32.gmra.mxu0 %v1414
          %v1470 = vpop.f32.mrf.mxu0
          %v1471 = vadd.f32 0.0, %v1470
          %1472 = vmatmul.f32.gmra.mxu0 %v1416
          %v1473 = vpop.f32.mrf.mxu0
          %v1474 = vadd.f32 0.0, %v1473
          %1475 = vdwg.mxu0
          %1476 = vmatpush.msra.mxu0 0.0
          %1477 = vmatpush.msra.mxu0 0.0
          %1478 = vmatpush.msra.mxu0 0.0
          %1479 = vmatpush.msra.mxu0 0.0
          %1480 = vmatpush.msra.mxu0 0.0
          %1481 = vmatpush.msra.mxu0 0.0
          %1482 = vmatpush.msra.mxu0 0.0
          %1483 = vmatpush.msra.mxu0 0.0
          %1484 = vmatpush.msra.mxu0 0.0
          %1485 = vmatpush.msra.mxu0 0.0
          %1486 = vmatpush.msra.mxu0 0.0
          %1487 = vmatpush.msra.mxu0 0.0
          %1488 = vmatpush.msra.mxu0 %v1388
          %1489 = vmatpush.msra.mxu0 %v1382
          %1490 = vmatpush.msra.mxu0 %v1376
          %1491 = vmatpush.msra.mxu0 %v1370
          %1492 = vmatmul.f32.gmra.mxu0 %v1410
          %v1493 = vpop.f32.mrf.mxu0
          %v1494 = vadd.f32 0.0, %v1493
          %1495 = vmatmul.f32.gmra.mxu0 %v1412
          %v1496 = vpop.f32.mrf.mxu0
          %v1497 = vadd.f32 0.0, %v1496
          %1498 = vmatmul.f32.gmra.mxu0 %v1414
          %v1499 = vpop.f32.mrf.mxu0
          %v1500 = vadd.f32 0.0, %v1499
          %1501 = vmatmul.f32.gmra.mxu0 %v1416
          %v1502 = vpop.f32.mrf.mxu0
          %v1503 = vadd.f32 0.0, %v1502
          %1504 = vdwg.mxu0
          %v1505 = vadd.f32 %v1345, %v1436
          %v1506 = vadd.f32 %v1346, %v1465
          %v1507 = vadd.f32 %v1347, %v1494
          %v1508 = vadd.f32 %v1348, %v1439
          %v1509 = vadd.f32 %v1349, %v1468
          %v1510 = vadd.f32 %v1350, %v1497
          %v1511 = vadd.f32 %v1351, %v1442
          %v1512 = vadd.f32 %v1352, %v1471
          %v1513 = vadd.f32 %v1353, %v1500
          %v1514 = vadd.f32 %v1354, %v1445
          %v1515 = vadd.f32 %v1355, %v1474
          %v1516 = vadd.f32 %v1356, %v1503
          %1517 = vrot.lane.b32.xlu0 %v289, 90
          %v1518 = vpop.permute.xlu0 %1517
          %1519 = vrot.lane.b32.xlu0 %v290, 90
          %v1520 = vpop.permute.xlu0 %1519
          %1521 = vrot.lane.b32.xlu0 %v291, 90
          %v1522 = vpop.permute.xlu0 %1521
          %1523 = vrot.lane.b32.xlu0 %v292, 90
          %v1524 = vpop.permute.xlu0 %1523
          %1525 = vrot.lane.b32.xlu0 %v293, 90
          %v1526 = vpop.permute.xlu0 %1525
          %1527 = vrot.lane.b32.xlu0 %v294, 90
          %v1528 = vpop.permute.xlu0 %1527
          %1529 = vrot.lane.b32.xlu0 %v295, 90
          %v1530 = vpop.permute.xlu0 %1529
          %1531 = vrot.lane.b32.xlu0 %v296, 90
          %v1532 = vpop.permute.xlu0 %1531
          %1533 = vrot.lane.b32.xlu0 %v297, 90
          %v1534 = vpop.permute.xlu0 %1533
          %1535 = vrot.lane.b32.xlu0 %v298, 90
          %v1536 = vpop.permute.xlu0 %1535
          %1537 = vrot.lane.b32.xlu0 %v299, 90
          %v1538 = vpop.permute.xlu0 %1537
          %1539 = vrot.lane.b32.xlu0 %v300, 90
          %v1540 = vpop.permute.xlu0 %1539
          %vm1541 = vcmask 736256
          %v1542 = vsel %vm1541, %v1518, %v1520
          %v1543 = vsel %vm1541, %v1520, %v1522
          %v1544 = vsel %vm1541, %v1524, %v1526
          %v1545 = vsel %vm1541, %v1526, %v1528
          %v1546 = vsel %vm1541, %v1530, %v1532
          %v1547 = vsel %vm1541, %v1532, %v1534
          %v1548 = vsel %vm1541, %v1536, %v1538
          %v1549 = vsel %vm1541, %v1538, %v1540
          %v1563 = vsel %vm370, %v279, 0
          %v1566 = vsel %vm370, %v282, 0
          %v1569 = vsel %vm370, %v285, 0
          %v1572 = vsel %vm370, %v288, 0
          %1574 = vmatpush.msra.mxu0 0.0
          %1575 = vmatpush.msra.mxu0 0.0
          %1576 = vmatpush.msra.mxu0 0.0
          %1577 = vmatpush.msra.mxu0 0.0
          %1578 = vmatpush.msra.mxu0 0.0
          %1579 = vmatpush.msra.mxu0 0.0
          %1580 = vmatpush.msra.mxu0 0.0
          %1581 = vmatpush.msra.mxu0 0.0
          %1582 = vmatpush.msra.mxu0 0.0
          %1583 = vmatpush.msra.mxu0 0.0
          %1584 = vmatpush.msra.mxu0 0.0
          %1585 = vmatpush.msra.mxu0 0.0
          %1586 = vmatpush.msra.mxu0 %v1548
          %1587 = vmatpush.msra.mxu0 %v1546
          %1588 = vmatpush.msra.mxu0 %v1544
          %1589 = vmatpush.msra.mxu0 %v1542
          %1590 = vmatmul.f32.gmra.mxu0 %v1563
          %v1591 = vpop.f32.mrf.mxu0
          %v1592 = vadd.f32 0.0, %v1591
          %1593 = vmatmul.f32.gmra.mxu0 %v1566
          %v1594 = vpop.f32.mrf.mxu0
          %v1595 = vadd.f32 0.0, %v1594
          %1596 = vmatmul.f32.gmra.mxu0 %v1569
          %v1597 = vpop.f32.mrf.mxu0
          %v1598 = vadd.f32 0.0, %v1597
          %1599 = vmatmul.f32.gmra.mxu0 %v1572
          %v1600 = vpop.f32.mrf.mxu0
          %v1601 = vadd.f32 0.0, %v1600
          %1602 = vdwg.mxu0
          %1603 = vmatpush.msra.mxu0 0.0
          %1604 = vmatpush.msra.mxu0 0.0
          %1605 = vmatpush.msra.mxu0 0.0
          %1606 = vmatpush.msra.mxu0 0.0
          %1607 = vmatpush.msra.mxu0 0.0
          %1608 = vmatpush.msra.mxu0 0.0
          %1609 = vmatpush.msra.mxu0 0.0
          %1610 = vmatpush.msra.mxu0 0.0
          %1611 = vmatpush.msra.mxu0 0.0
          %1612 = vmatpush.msra.mxu0 0.0
          %1613 = vmatpush.msra.mxu0 0.0
          %1614 = vmatpush.msra.mxu0 0.0
          %1615 = vmatpush.msra.mxu0 %v1549
          %1616 = vmatpush.msra.mxu0 %v1547
          %1617 = vmatpush.msra.mxu0 %v1545
          %1618 = vmatpush.msra.mxu0 %v1543
          %1619 = vmatmul.f32.gmra.mxu0 %v1563
          %v1620 = vpop.f32.mrf.mxu0
          %v1621 = vadd.f32 0.0, %v1620
          %1622 = vmatmul.f32.gmra.mxu0 %v1566
          %v1623 = vpop.f32.mrf.mxu0
          %v1624 = vadd.f32 0.0, %v1623
          %1625 = vmatmul.f32.gmra.mxu0 %v1569
          %v1626 = vpop.f32.mrf.mxu0
          %v1627 = vadd.f32 0.0, %v1626
          %1628 = vmatmul.f32.gmra.mxu0 %v1572
          %v1629 = vpop.f32.mrf.mxu0
          %v1630 = vadd.f32 0.0, %v1629
          %1631 = vdwg.mxu0
          %1632 = vmatpush.msra.mxu0 0.0
          %1633 = vmatpush.msra.mxu0 0.0
          %1634 = vmatpush.msra.mxu0 0.0
          %1635 = vmatpush.msra.mxu0 0.0
          %1636 = vmatpush.msra.mxu0 0.0
          %1637 = vmatpush.msra.mxu0 0.0
          %1638 = vmatpush.msra.mxu0 0.0
          %1639 = vmatpush.msra.mxu0 0.0
          %1640 = vmatpush.msra.mxu0 0.0
          %1641 = vmatpush.msra.mxu0 0.0
          %1642 = vmatpush.msra.mxu0 0.0
          %1643 = vmatpush.msra.mxu0 0.0
          %1644 = vmatpush.msra.mxu0 %v1540
          %1645 = vmatpush.msra.mxu0 %v1534
          %1646 = vmatpush.msra.mxu0 %v1528
          %1647 = vmatpush.msra.mxu0 %v1522
          %1648 = vmatmul.f32.gmra.mxu0 %v1563
          %v1649 = vpop.f32.mrf.mxu0
          %v1650 = vadd.f32 0.0, %v1649
          %1651 = vmatmul.f32.gmra.mxu0 %v1566
          %v1652 = vpop.f32.mrf.mxu0
          %v1653 = vadd.f32 0.0, %v1652
          %1654 = vmatmul.f32.gmra.mxu0 %v1569
          %v1655 = vpop.f32.mrf.mxu0
          %v1656 = vadd.f32 0.0, %v1655
          %1657 = vmatmul.f32.gmra.mxu0 %v1572
          %v1658 = vpop.f32.mrf.mxu0
          %v1659 = vadd.f32 0.0, %v1658
          %1660 = vdwg.mxu0
          %v1661 = vadd.f32 %v1505, %v1592
          %v1662 = vadd.f32 %v1506, %v1621
          %v1663 = vadd.f32 %v1507, %v1650
          %v1664 = vadd.f32 %v1508, %v1595
          %v1665 = vadd.f32 %v1509, %v1624
          %v1666 = vadd.f32 %v1510, %v1653
          %v1667 = vadd.f32 %v1511, %v1598
          %v1668 = vadd.f32 %v1512, %v1627
          %v1669 = vadd.f32 %v1513, %v1656
          %v1670 = vadd.f32 %v1514, %v1601
          %v1671 = vadd.f32 %v1515, %v1630
          %v1672 = vadd.f32 %v1516, %v1659
          %s1673 = smul.u32 %s269, 32
          %s1674 = scalar_lea.vmem %s3, %s1673
          %v1675 = vld [vmem:[%s1674] sm:$0xff]
          %v1676 = vld [vmem:[%s1674 + $0x8] sm:$0xff]
          %v1677 = vld [vmem:[%s1674 + $0x10] sm:$0xff]
          %v1678 = vld [vmem:[%s1674 + $0x18] sm:$0xff]
          %1680 = vset.pattern.permute.xlu0 0
          %1681 = vperm.xlu0 %1680, %v1675
          %v1682 = vpop.permute.xlu0 %1681
          %1685 = vset.pattern.permute.xlu0 0
          %1686 = vperm.xlu0 %1685, %v1676
          %v1687 = vpop.permute.xlu0 %1686
          %1690 = vset.pattern.permute.xlu0 0
          %1691 = vperm.xlu0 %1690, %v1677
          %v1692 = vpop.permute.xlu0 %1691
          %1695 = vset.pattern.permute.xlu0 0
          %1696 = vperm.xlu0 %1695, %v1678
          %v1697 = vpop.permute.xlu0 %1696
          %v1699 = vadd.f32 %v1661, %v1682
          %v1700 = vadd.f32 %v1662, %v1682
          %v1701 = vadd.f32 %v1663, %v1682
          %v1702 = vadd.f32 %v1664, %v1687
          %v1703 = vadd.f32 %v1665, %v1687
          %v1704 = vadd.f32 %v1666, %v1687
          %v1705 = vadd.f32 %v1667, %v1692
          %v1706 = vadd.f32 %v1668, %v1692
          %v1707 = vadd.f32 %v1669, %v1692
          %v1708 = vadd.f32 %v1670, %v1697
          %v1709 = vadd.f32 %v1671, %v1697
          %v1710 = vadd.f32 %v1672, %v1697
          %v1711 = vmax.f32 %v1699, 0.0
          %v1712 = vmax.f32 %v1700, 0.0
          %v1713 = vmax.f32 %v1701, 0.0
          %v1714 = vmax.f32 %v1702, 0.0
          %v1715 = vmax.f32 %v1703, 0.0
          %v1716 = vmax.f32 %v1704, 0.0
          %v1717 = vmax.f32 %v1705, 0.0
          %v1718 = vmax.f32 %v1706, 0.0
          %v1719 = vmax.f32 %v1707, 0.0
          %v1720 = vmax.f32 %v1708, 0.0
          %v1721 = vmax.f32 %v1709, 0.0
          %v1722 = vmax.f32 %v1710, 0.0
          %v1724 = vperm.slane %v267, 0
          %v1725 = vperm.slane %v267, 1
          %v1726 = vperm.slane %v267, 2
          %v1730 = vmul.f32 %v1711, %v1724
          %v1731 = vmul.f32 %v1712, %v1725
          %v1732 = vmul.f32 %v1713, %v1726
          %v1733 = vmul.f32 %v1714, %v1724
          %v1734 = vmul.f32 %v1715, %v1725
          %v1735 = vmul.f32 %v1716, %v1726
          %v1736 = vmul.f32 %v1717, %v1724
          %v1737 = vmul.f32 %v1718, %v1725
          %v1738 = vmul.f32 %v1719, %v1726
          %v1739 = vmul.f32 %v1720, %v1724
          %v1740 = vmul.f32 %v1721, %v1725
          %v1741 = vmul.f32 %v1722, %v1726
          %1754 = vrot.lane.b32.xlu0 %v1730, 19
          %v1755 = vpop.permute.xlu0 %1754
          %1756 = vrot.lane.b32.xlu0 %v1731, 19
          %v1757 = vpop.permute.xlu0 %1756
          %1758 = vrot.lane.b32.xlu0 %v1732, 19
          %v1759 = vpop.permute.xlu0 %1758
          %1760 = vrot.lane.b32.xlu0 %v1733, 19
          %v1761 = vpop.permute.xlu0 %1760
          %1762 = vrot.lane.b32.xlu0 %v1734, 19
          %v1763 = vpop.permute.xlu0 %1762
          %1764 = vrot.lane.b32.xlu0 %v1735, 19
          %v1765 = vpop.permute.xlu0 %1764
          %1766 = vrot.lane.b32.xlu0 %v1736, 19
          %v1767 = vpop.permute.xlu0 %1766
          %1768 = vrot.lane.b32.xlu0 %v1737, 19
          %v1769 = vpop.permute.xlu0 %1768
          %1770 = vrot.lane.b32.xlu0 %v1738, 19
          %v1771 = vpop.permute.xlu0 %1770
          %1772 = vrot.lane.b32.xlu0 %v1739, 19
          %v1773 = vpop.permute.xlu0 %1772
          %1774 = vrot.lane.b32.xlu0 %v1740, 19
          %v1775 = vpop.permute.xlu0 %1774
          %1776 = vrot.lane.b32.xlu0 %v1741, 19
          %v1777 = vpop.permute.xlu0 %1776
          %v1778 = vsel %vm215, %v1755, %v1757
          %v1779 = vsel %vm215, %v1757, %v1759
          %v1780 = vsel %vm215, %v1761, %v1763
          %v1781 = vsel %vm215, %v1763, %v1765
          %v1782 = vsel %vm215, %v1767, %v1769
          %v1783 = vsel %vm215, %v1769, %v1771
          %v1784 = vsel %vm215, %v1773, %v1775
          %v1785 = vsel %vm215, %v1775, %v1777
          %1798 = vst.msk [vmem:[#allocation2] sm:$0xff] %vm230, %v1755
          %1799 = vst [vmem:[#allocation2 + $0x8] sm:$0xff] %v1778
          %1800 = vst.msk [vmem:[#allocation2 + $0x10] sm:$0xff] %vm233, %v1779
          %1801 = vst.msk [vmem:[#allocation2 + $0x18] sm:$0xff] %vm230, %v1761
          %1802 = vst [vmem:[#allocation2 + $0x20] sm:$0xff] %v1780
          %1803 = vst.msk [vmem:[#allocation2 + $0x28] sm:$0xff] %vm233, %v1781
          %1804 = vst.msk [vmem:[#allocation2 + $0x30] sm:$0xff] %vm230, %v1767
          %1805 = vst [vmem:[#allocation2 + $0x38] sm:$0xff] %v1782
          %1806 = vst.msk [vmem:[#allocation2 + $0x40] sm:$0xff] %vm233, %v1783
          %1807 = vst.msk [vmem:[#allocation2 + $0x48] sm:$0xff] %vm230, %v1773
          %1808 = vst [vmem:[#allocation2 + $0x50] sm:$0xff] %v1784
          %1809 = vst.msk [vmem:[#allocation2 + $0x58] sm:$0xff] %vm233, %v1785
        $region45: #{dncnn_forward_pallas.1} parent=35 // loop_footer
          %s273 = sadd.s32 1, %s269
        $region46: #{dncnn_forward_pallas.1} parent=35 // loop_footer_branch
          %268 = sbr.rel target = $region42
        $region47: #{dncnn_forward_pallas.1} parent=35 // loop_exit
          _
        %s1810 = scalar_lea.vmem [#allocation3], 480
        %v1811 = vld [vmem:[%s1810] sm:$0xff]
        %v1812 = vld [vmem:[%s1810 + $0x8] sm:$0xff]
        %v1813 = vld [vmem:[%s1810 + $0x10] sm:$0xff]
        %v1814 = vld [vmem:[%s1810 + $0x18] sm:$0xff]
        %v1815 = vld [vmem:[%s1810 + $0x20] sm:$0xff]
        %v1816 = vld [vmem:[%s1810 + $0x28] sm:$0xff]
        %v1817 = vld [vmem:[%s1810 + $0x30] sm:$0xff]
        %v1818 = vld [vmem:[%s1810 + $0x38] sm:$0xff]
        %v1819 = vld [vmem:[%s1810 + $0x40] sm:$0xff]
        %v1820 = vld [vmem:[%s1810 + $0x48] sm:$0xff]
        %v1821 = vld [vmem:[%s1810 + $0x50] sm:$0xff]
        %v1822 = vld [vmem:[%s1810 + $0x58] sm:$0xff]
        %v1823 = vld [vmem:[#allocation2] sm:$0xff]
        %v1824 = vld [vmem:[#allocation2 + $0x8] sm:$0xff]
        %v1825 = vld [vmem:[#allocation2 + $0x10] sm:$0xff]
        %v1826 = vld [vmem:[#allocation2 + $0x18] sm:$0xff]
        %v1827 = vld [vmem:[#allocation2 + $0x20] sm:$0xff]
        %v1828 = vld [vmem:[#allocation2 + $0x28] sm:$0xff]
        %v1829 = vld [vmem:[#allocation2 + $0x30] sm:$0xff]
        %v1830 = vld [vmem:[#allocation2 + $0x38] sm:$0xff]
        %v1831 = vld [vmem:[#allocation2 + $0x40] sm:$0xff]
        %v1832 = vld [vmem:[#allocation2 + $0x48] sm:$0xff]
        %v1833 = vld [vmem:[#allocation2 + $0x50] sm:$0xff]
        %v1834 = vld [vmem:[#allocation2 + $0x58] sm:$0xff]
        %1839 = vrot.lane.b32.xlu0 %v1811, 96
        %v1840 = vpop.permute.xlu0 %1839
        %1841 = vrot.lane.b32.xlu0 %v1814, 96
        %v1842 = vpop.permute.xlu0 %1841
        %1843 = vrot.lane.b32.xlu0 %v1817, 96
        %v1844 = vpop.permute.xlu0 %1843
        %1845 = vrot.lane.b32.xlu0 %v1820, 96
        %v1846 = vpop.permute.xlu0 %1845
        %1859 = vrot.lane.b32.xlu0 %v1823, 127
        %v1860 = vpop.permute.xlu0 %1859
        %1861 = vrot.lane.b32.xlu0 %v1824, 127
        %v1862 = vpop.permute.xlu0 %1861
        %1863 = vrot.lane.b32.xlu0 %v1825, 127
        %v1864 = vpop.permute.xlu0 %1863
        %1865 = vrot.lane.b32.xlu0 %v1826, 127
        %v1866 = vpop.permute.xlu0 %1865
        %1867 = vrot.lane.b32.xlu0 %v1827, 127
        %v1868 = vpop.permute.xlu0 %1867
        %1869 = vrot.lane.b32.xlu0 %v1828, 127
        %v1870 = vpop.permute.xlu0 %1869
        %1871 = vrot.lane.b32.xlu0 %v1829, 127
        %v1872 = vpop.permute.xlu0 %1871
        %1873 = vrot.lane.b32.xlu0 %v1830, 127
        %v1874 = vpop.permute.xlu0 %1873
        %1875 = vrot.lane.b32.xlu0 %v1831, 127
        %v1876 = vpop.permute.xlu0 %1875
        %1877 = vrot.lane.b32.xlu0 %v1832, 127
        %v1878 = vpop.permute.xlu0 %1877
        %1879 = vrot.lane.b32.xlu0 %v1833, 127
        %v1880 = vpop.permute.xlu0 %1879
        %1881 = vrot.lane.b32.xlu0 %v1834, 127
        %v1882 = vpop.permute.xlu0 %1881
        %vm1883 = vcmask 1039360
        %v1884 = vsel %vm1883, %v1860, %v1862
        %v1885 = vsel %vm1883, %v1862, %v1864
        %v1886 = vsel %vm1883, %v1866, %v1868
        %v1887 = vsel %vm1883, %v1868, %v1870
        %v1888 = vsel %vm1883, %v1872, %v1874
        %v1889 = vsel %vm1883, %v1874, %v1876
        %v1890 = vsel %vm1883, %v1878, %v1880
        %v1891 = vsel %vm1883, %v1880, %v1882
        %vm1904 = vcmask 261120
        %v1905 = vsel %vm1904, %v1840, 0
        %v1907 = vsel %vm1904, %v1842, 0
        %v1909 = vsel %vm1904, %v1844, 0
        %v1911 = vsel %vm1904, %v1846, 0
        %1913 = vmatpush.msra.mxu0 0.0
        %1914 = vmatpush.msra.mxu0 0.0
        %1915 = vmatpush.msra.mxu0 0.0
        %1916 = vmatpush.msra.mxu0 0.0
        %1917 = vmatpush.msra.mxu0 0.0
        %1918 = vmatpush.msra.mxu0 0.0
        %1919 = vmatpush.msra.mxu0 0.0
        %1920 = vmatpush.msra.mxu0 0.0
        %1921 = vmatpush.msra.mxu0 0.0
        %1922 = vmatpush.msra.mxu0 0.0
        %1923 = vmatpush.msra.mxu0 0.0
        %1924 = vmatpush.msra.mxu0 0.0
        %1925 = vmatpush.msra.mxu0 %v1890
        %1926 = vmatpush.msra.mxu0 %v1888
        %1927 = vmatpush.msra.mxu0 %v1886
        %1928 = vmatpush.msra.mxu0 %v1884
        %1929 = vmatmul.f32.gmra.mxu0 %v1905
        %v1930 = vpop.f32.mrf.mxu0
        %v1931 = vadd.f32 0.0, %v1930
        %1932 = vmatmul.f32.gmra.mxu0 %v1907
        %v1933 = vpop.f32.mrf.mxu0
        %1934 = vmatmul.f32.gmra.mxu0 %v1909
        %v1935 = vpop.f32.mrf.mxu0
        %1936 = vmatmul.f32.gmra.mxu0 %v1911
        %v1937 = vpop.f32.mrf.mxu0
        %1938 = vdwg.mxu0
        %1939 = vmatpush.msra.mxu0 0.0
        %1940 = vmatpush.msra.mxu0 0.0
        %1941 = vmatpush.msra.mxu0 0.0
        %1942 = vmatpush.msra.mxu0 0.0
        %1943 = vmatpush.msra.mxu0 0.0
        %1944 = vmatpush.msra.mxu0 0.0
        %1945 = vmatpush.msra.mxu0 0.0
        %1946 = vmatpush.msra.mxu0 0.0
        %1947 = vmatpush.msra.mxu0 0.0
        %1948 = vmatpush.msra.mxu0 0.0
        %1949 = vmatpush.msra.mxu0 0.0
        %1950 = vmatpush.msra.mxu0 0.0
        %1951 = vmatpush.msra.mxu0 %v1891
        %1952 = vmatpush.msra.mxu0 %v1889
        %1953 = vmatpush.msra.mxu0 %v1887
        %1954 = vmatpush.msra.mxu0 %v1885
        %1955 = vmatmul.f32.gmra.mxu0 %v1905
        %v1956 = vpop.f32.mrf.mxu0
        %v1957 = vadd.f32 0.0, %v1956
        %1958 = vmatmul.f32.gmra.mxu0 %v1907
        %v1959 = vpop.f32.mrf.mxu0
        %1960 = vmatmul.f32.gmra.mxu0 %v1909
        %v1961 = vpop.f32.mrf.mxu0
        %1962 = vmatmul.f32.gmra.mxu0 %v1911
        %v1963 = vpop.f32.mrf.mxu0
        %1964 = vdwg.mxu0
        %1965 = vmatpush.msra.mxu0 0.0
        %1966 = vmatpush.msra.mxu0 0.0
        %1967 = vmatpush.msra.mxu0 0.0
        %1968 = vmatpush.msra.mxu0 0.0
        %1969 = vmatpush.msra.mxu0 0.0
        %1970 = vmatpush.msra.mxu0 0.0
        %1971 = vmatpush.msra.mxu0 0.0
        %1972 = vmatpush.msra.mxu0 0.0
        %1973 = vmatpush.msra.mxu0 0.0
        %1974 = vmatpush.msra.mxu0 0.0
        %1975 = vmatpush.msra.mxu0 0.0
        %1976 = vmatpush.msra.mxu0 0.0
        %1977 = vmatpush.msra.mxu0 %v1882
        %1978 = vmatpush.msra.mxu0 %v1876
        %1979 = vmatpush.msra.mxu0 %v1870
        %1980 = vmatpush.msra.mxu0 %v1864
        %1981 = vmatmul.f32.gmra.mxu0 %v1905
        %v1982 = vpop.f32.mrf.mxu0
        %v1983 = vadd.f32 0.0, %v1982
        %1984 = vmatmul.f32.gmra.mxu0 %v1907
        %v1985 = vpop.f32.mrf.mxu0
        %1986 = vmatmul.f32.gmra.mxu0 %v1909
        %v1987 = vpop.f32.mrf.mxu0
        %1988 = vmatmul.f32.gmra.mxu0 %v1911
        %v1989 = vpop.f32.mrf.mxu0
        %1990 = vdwg.mxu0
        %v1991 = vsel %vm1904, %v1811, 0
        %v1993 = vsel %vm1904, %v1814, 0
        %v1995 = vsel %vm1904, %v1817, 0
        %v1997 = vsel %vm1904, %v1820, 0
        %1999 = vmatpush.msra.mxu0 0.0
        %2000 = vmatpush.msra.mxu0 0.0
        %2001 = vmatpush.msra.mxu0 0.0
        %2002 = vmatpush.msra.mxu0 0.0
        %2003 = vmatpush.msra.mxu0 0.0
        %2004 = vmatpush.msra.mxu0 0.0
        %2005 = vmatpush.msra.mxu0 0.0
        %2006 = vmatpush.msra.mxu0 0.0
        %2007 = vmatpush.msra.mxu0 0.0
        %2008 = vmatpush.msra.mxu0 0.0
        %2009 = vmatpush.msra.mxu0 0.0
        %2010 = vmatpush.msra.mxu0 0.0
        %2011 = vmatpush.msra.mxu0 %v1832
        %2012 = vmatpush.msra.mxu0 %v1829
        %2013 = vmatpush.msra.mxu0 %v1826
        %2014 = vmatpush.msra.mxu0 %v1823
        %2015 = vmatmul.f32.gmra.mxu0 %v1991
        %v2016 = vpop.f32.mrf.mxu0
        %v2017 = vadd.f32 %v1931, %v2016
        %2018 = vmatmul.f32.gmra.mxu0 %v1993
        %v2019 = vpop.f32.mrf.mxu0
        %2020 = vmatmul.f32.gmra.mxu0 %v1995
        %v2021 = vpop.f32.mrf.mxu0
        %2022 = vmatmul.f32.gmra.mxu0 %v1997
        %v2023 = vpop.f32.mrf.mxu0
        %2024 = vdwg.mxu0
        %2025 = vmatpush.msra.mxu0 0.0
        %2026 = vmatpush.msra.mxu0 0.0
        %2027 = vmatpush.msra.mxu0 0.0
        %2028 = vmatpush.msra.mxu0 0.0
        %2029 = vmatpush.msra.mxu0 0.0
        %2030 = vmatpush.msra.mxu0 0.0
        %2031 = vmatpush.msra.mxu0 0.0
        %2032 = vmatpush.msra.mxu0 0.0
        %2033 = vmatpush.msra.mxu0 0.0
        %2034 = vmatpush.msra.mxu0 0.0
        %2035 = vmatpush.msra.mxu0 0.0
        %2036 = vmatpush.msra.mxu0 0.0
        %2037 = vmatpush.msra.mxu0 %v1833
        %2038 = vmatpush.msra.mxu0 %v1830
        %2039 = vmatpush.msra.mxu0 %v1827
        %2040 = vmatpush.msra.mxu0 %v1824
        %2041 = vmatmul.f32.gmra.mxu0 %v1991
        %v2042 = vpop.f32.mrf.mxu0
        %v2043 = vadd.f32 %v1957, %v2042
        %2044 = vmatmul.f32.gmra.mxu0 %v1993
        %v2045 = vpop.f32.mrf.mxu0
        %2046 = vmatmul.f32.gmra.mxu0 %v1995
        %v2047 = vpop.f32.mrf.mxu0
        %2048 = vmatmul.f32.gmra.mxu0 %v1997
        %v2049 = vpop.f32.mrf.mxu0
        %2050 = vdwg.mxu0
        %2051 = vmatpush.msra.mxu0 0.0
        %2052 = vmatpush.msra.mxu0 0.0
        %2053 = vmatpush.msra.mxu0 0.0
        %2054 = vmatpush.msra.mxu0 0.0
        %2055 = vmatpush.msra.mxu0 0.0
        %2056 = vmatpush.msra.mxu0 0.0
        %2057 = vmatpush.msra.mxu0 0.0
        %2058 = vmatpush.msra.mxu0 0.0
        %2059 = vmatpush.msra.mxu0 0.0
        %2060 = vmatpush.msra.mxu0 0.0
        %2061 = vmatpush.msra.mxu0 0.0
        %2062 = vmatpush.msra.mxu0 0.0
        %2063 = vmatpush.msra.mxu0 %v1834
        %2064 = vmatpush.msra.mxu0 %v1831
        %2065 = vmatpush.msra.mxu0 %v1828
        %2066 = vmatpush.msra.mxu0 %v1825
        %2067 = vmatmul.f32.gmra.mxu0 %v1991
        %v2068 = vpop.f32.mrf.mxu0
        %v2069 = vadd.f32 %v1983, %v2068
        %2070 = vmatmul.f32.gmra.mxu0 %v1993
        %v2071 = vpop.f32.mrf.mxu0
        %2072 = vmatmul.f32.gmra.mxu0 %v1995
        %v2073 = vpop.f32.mrf.mxu0
        %2074 = vmatmul.f32.gmra.mxu0 %v1997
        %v2075 = vpop.f32.mrf.mxu0
        %2076 = vdwg.mxu0
        %2077 = vrot.lane.b32.xlu0 %v1811, 64
        %v2078 = vpop.permute.xlu0 %2077
        %2079 = vrot.lane.b32.xlu0 %v1814, 64
        %v2080 = vpop.permute.xlu0 %2079
        %2081 = vrot.lane.b32.xlu0 %v1817, 64
        %v2082 = vpop.permute.xlu0 %2081
        %2083 = vrot.lane.b32.xlu0 %v1820, 64
        %v2084 = vpop.permute.xlu0 %2083
        %2085 = vrot.lane.b32.xlu0 %v1823, 126
        %v2086 = vpop.permute.xlu0 %2085
        %2087 = vrot.lane.b32.xlu0 %v1824, 126
        %v2088 = vpop.permute.xlu0 %2087
        %2089 = vrot.lane.b32.xlu0 %v1825, 126
        %v2090 = vpop.permute.xlu0 %2089
        %2091 = vrot.lane.b32.xlu0 %v1826, 126
        %v2092 = vpop.permute.xlu0 %2091
        %2093 = vrot.lane.b32.xlu0 %v1827, 126
        %v2094 = vpop.permute.xlu0 %2093
        %2095 = vrot.lane.b32.xlu0 %v1828, 126
        %v2096 = vpop.permute.xlu0 %2095
        %2097 = vrot.lane.b32.xlu0 %v1829, 126
        %v2098 = vpop.permute.xlu0 %2097
        %2099 = vrot.lane.b32.xlu0 %v1830, 126
        %v2100 = vpop.permute.xlu0 %2099
        %2101 = vrot.lane.b32.xlu0 %v1831, 126
        %v2102 = vpop.permute.xlu0 %2101
        %2103 = vrot.lane.b32.xlu0 %v1832, 126
        %v2104 = vpop.permute.xlu0 %2103
        %2105 = vrot.lane.b32.xlu0 %v1833, 126
        %v2106 = vpop.permute.xlu0 %2105
        %2107 = vrot.lane.b32.xlu0 %v1834, 126
        %v2108 = vpop.permute.xlu0 %2107
        %vm2109 = vcmask 1031168
        %v2110 = vsel %vm2109, %v2086, %v2088
        %v2111 = vsel %vm2109, %v2088, %v2090
        %v2112 = vsel %vm2109, %v2092, %v2094
        %v2113 = vsel %vm2109, %v2094, %v2096
        %v2114 = vsel %vm2109, %v2098, %v2100
        %v2115 = vsel %vm2109, %v2100, %v2102
        %v2116 = vsel %vm2109, %v2104, %v2106
        %v2117 = vsel %vm2109, %v2106, %v2108
        %v2130 = vsel %vm1904, %v2078, 0
        %v2132 = vsel %vm1904, %v2080, 0
        %v2134 = vsel %vm1904, %v2082, 0
        %v2136 = vsel %vm1904, %v2084, 0
        %2138 = vmatpush.msra.mxu0 0.0
        %2139 = vmatpush.msra.mxu0 0.0
        %2140 = vmatpush.msra.mxu0 0.0
        %2141 = vmatpush.msra.mxu0 0.0
        %2142 = vmatpush.msra.mxu0 0.0
        %2143 = vmatpush.msra.mxu0 0.0
        %2144 = vmatpush.msra.mxu0 0.0
        %2145 = vmatpush.msra.mxu0 0.0
        %2146 = vmatpush.msra.mxu0 0.0
        %2147 = vmatpush.msra.mxu0 0.0
        %2148 = vmatpush.msra.mxu0 0.0
        %2149 = vmatpush.msra.mxu0 0.0
        %2150 = vmatpush.msra.mxu0 %v2116
        %2151 = vmatpush.msra.mxu0 %v2114
        %2152 = vmatpush.msra.mxu0 %v2112
        %2153 = vmatpush.msra.mxu0 %v2110
        %2154 = vmatmul.f32.gmra.mxu0 %v2130
        %v2155 = vpop.f32.mrf.mxu0
        %v2156 = vadd.f32 0.0, %v2155
        %2157 = vmatmul.f32.gmra.mxu0 %v2132
        %v2158 = vpop.f32.mrf.mxu0
        %2159 = vmatmul.f32.gmra.mxu0 %v2134
        %v2160 = vpop.f32.mrf.mxu0
        %2161 = vmatmul.f32.gmra.mxu0 %v2136
        %v2162 = vpop.f32.mrf.mxu0
        %2163 = vdwg.mxu0
        %2164 = vmatpush.msra.mxu0 0.0
        %2165 = vmatpush.msra.mxu0 0.0
        %2166 = vmatpush.msra.mxu0 0.0
        %2167 = vmatpush.msra.mxu0 0.0
        %2168 = vmatpush.msra.mxu0 0.0
        %2169 = vmatpush.msra.mxu0 0.0
        %2170 = vmatpush.msra.mxu0 0.0
        %2171 = vmatpush.msra.mxu0 0.0
        %2172 = vmatpush.msra.mxu0 0.0
        %2173 = vmatpush.msra.mxu0 0.0
        %2174 = vmatpush.msra.mxu0 0.0
        %2175 = vmatpush.msra.mxu0 0.0
        %2176 = vmatpush.msra.mxu0 %v2117
        %2177 = vmatpush.msra.mxu0 %v2115
        %2178 = vmatpush.msra.mxu0 %v2113
        %2179 = vmatpush.msra.mxu0 %v2111
        %2180 = vmatmul.f32.gmra.mxu0 %v2130
        %v2181 = vpop.f32.mrf.mxu0
        %v2182 = vadd.f32 0.0, %v2181
        %2183 = vmatmul.f32.gmra.mxu0 %v2132
        %v2184 = vpop.f32.mrf.mxu0
        %2185 = vmatmul.f32.gmra.mxu0 %v2134
        %v2186 = vpop.f32.mrf.mxu0
        %2187 = vmatmul.f32.gmra.mxu0 %v2136
        %v2188 = vpop.f32.mrf.mxu0
        %2189 = vdwg.mxu0
        %2190 = vmatpush.msra.mxu0 0.0
        %2191 = vmatpush.msra.mxu0 0.0
        %2192 = vmatpush.msra.mxu0 0.0
        %2193 = vmatpush.msra.mxu0 0.0
        %2194 = vmatpush.msra.mxu0 0.0
        %2195 = vmatpush.msra.mxu0 0.0
        %2196 = vmatpush.msra.mxu0 0.0
        %2197 = vmatpush.msra.mxu0 0.0
        %2198 = vmatpush.msra.mxu0 0.0
        %2199 = vmatpush.msra.mxu0 0.0
        %2200 = vmatpush.msra.mxu0 0.0
        %2201 = vmatpush.msra.mxu0 0.0
        %2202 = vmatpush.msra.mxu0 %v2108
        %2203 = vmatpush.msra.mxu0 %v2102
        %2204 = vmatpush.msra.mxu0 %v2096
        %2205 = vmatpush.msra.mxu0 %v2090
        %2206 = vmatmul.f32.gmra.mxu0 %v2130
        %v2207 = vpop.f32.mrf.mxu0
        %v2208 = vadd.f32 0.0, %v2207
        %2209 = vmatmul.f32.gmra.mxu0 %v2132
        %v2210 = vpop.f32.mrf.mxu0
        %2211 = vmatmul.f32.gmra.mxu0 %v2134
        %v2212 = vpop.f32.mrf.mxu0
        %2213 = vmatmul.f32.gmra.mxu0 %v2136
        %v2214 = vpop.f32.mrf.mxu0
        %2215 = vdwg.mxu0
        %v2216 = vadd.f32 %v2017, %v2156
        %v2217 = vadd.f32 %v2043, %v2182
        %v2218 = vadd.f32 %v2069, %v2208
        %2219 = vrot.lane.b32.xlu0 %v1811, 32
        %v2220 = vpop.permute.xlu0 %2219
        %2221 = vrot.lane.b32.xlu0 %v1814, 32
        %v2222 = vpop.permute.xlu0 %2221
        %2223 = vrot.lane.b32.xlu0 %v1817, 32
        %v2224 = vpop.permute.xlu0 %2223
        %2225 = vrot.lane.b32.xlu0 %v1820, 32
        %v2226 = vpop.permute.xlu0 %2225
        %2227 = vrot.lane.b32.xlu0 %v1823, 110
        %v2228 = vpop.permute.xlu0 %2227
        %2229 = vrot.lane.b32.xlu0 %v1824, 110
        %v2230 = vpop.permute.xlu0 %2229
        %2231 = vrot.lane.b32.xlu0 %v1825, 110
        %v2232 = vpop.permute.xlu0 %2231
        %2233 = vrot.lane.b32.xlu0 %v1826, 110
        %v2234 = vpop.permute.xlu0 %2233
        %2235 = vrot.lane.b32.xlu0 %v1827, 110
        %v2236 = vpop.permute.xlu0 %2235
        %2237 = vrot.lane.b32.xlu0 %v1828, 110
        %v2238 = vpop.permute.xlu0 %2237
        %2239 = vrot.lane.b32.xlu0 %v1829, 110
        %v2240 = vpop.permute.xlu0 %2239
        %2241 = vrot.lane.b32.xlu0 %v1830, 110
        %v2242 = vpop.permute.xlu0 %2241
        %2243 = vrot.lane.b32.xlu0 %v1831, 110
        %v2244 = vpop.permute.xlu0 %2243
        %2245 = vrot.lane.b32.xlu0 %v1832, 110
        %v2246 = vpop.permute.xlu0 %2245
        %2247 = vrot.lane.b32.xlu0 %v1833, 110
        %v2248 = vpop.permute.xlu0 %2247
        %2249 = vrot.lane.b32.xlu0 %v1834, 110
        %v2250 = vpop.permute.xlu0 %2249
        %vm2251 = vcmask 900096
        %v2252 = vsel %vm2251, %v2228, %v2230
        %v2253 = vsel %vm2251, %v2230, %v2232
        %v2254 = vsel %vm2251, %v2234, %v2236
        %v2255 = vsel %vm2251, %v2236, %v2238
        %v2256 = vsel %vm2251, %v2240, %v2242
        %v2257 = vsel %vm2251, %v2242, %v2244
        %v2258 = vsel %vm2251, %v2246, %v2248
        %v2259 = vsel %vm2251, %v2248, %v2250
        %v2272 = vsel %vm1904, %v2220, 0
        %v2274 = vsel %vm1904, %v2222, 0
        %v2276 = vsel %vm1904, %v2224, 0
        %v2278 = vsel %vm1904, %v2226, 0
        %2280 = vmatpush.msra.mxu0 0.0
        %2281 = vmatpush.msra.mxu0 0.0
        %2282 = vmatpush.msra.mxu0 0.0
        %2283 = vmatpush.msra.mxu0 0.0
        %2284 = vmatpush.msra.mxu0 0.0
        %2285 = vmatpush.msra.mxu0 0.0
        %2286 = vmatpush.msra.mxu0 0.0
        %2287 = vmatpush.msra.mxu0 0.0
        %2288 = vmatpush.msra.mxu0 0.0
        %2289 = vmatpush.msra.mxu0 0.0
        %2290 = vmatpush.msra.mxu0 0.0
        %2291 = vmatpush.msra.mxu0 0.0
        %2292 = vmatpush.msra.mxu0 %v2258
        %2293 = vmatpush.msra.mxu0 %v2256
        %2294 = vmatpush.msra.mxu0 %v2254
        %2295 = vmatpush.msra.mxu0 %v2252
        %2296 = vmatmul.f32.gmra.mxu0 %v2272
        %v2297 = vpop.f32.mrf.mxu0
        %v2298 = vadd.f32 0.0, %v2297
        %2299 = vmatmul.f32.gmra.mxu0 %v2274
        %v2300 = vpop.f32.mrf.mxu0
        %2301 = vmatmul.f32.gmra.mxu0 %v2276
        %v2302 = vpop.f32.mrf.mxu0
        %2303 = vmatmul.f32.gmra.mxu0 %v2278
        %v2304 = vpop.f32.mrf.mxu0
        %2305 = vdwg.mxu0
        %2306 = vmatpush.msra.mxu0 0.0
        %2307 = vmatpush.msra.mxu0 0.0
        %2308 = vmatpush.msra.mxu0 0.0
        %2309 = vmatpush.msra.mxu0 0.0
        %2310 = vmatpush.msra.mxu0 0.0
        %2311 = vmatpush.msra.mxu0 0.0
        %2312 = vmatpush.msra.mxu0 0.0
        %2313 = vmatpush.msra.mxu0 0.0
        %2314 = vmatpush.msra.mxu0 0.0
        %2315 = vmatpush.msra.mxu0 0.0
        %2316 = vmatpush.msra.mxu0 0.0
        %2317 = vmatpush.msra.mxu0 0.0
        %2318 = vmatpush.msra.mxu0 %v2259
        %2319 = vmatpush.msra.mxu0 %v2257
        %2320 = vmatpush.msra.mxu0 %v2255
        %2321 = vmatpush.msra.mxu0 %v2253
        %2322 = vmatmul.f32.gmra.mxu0 %v2272
        %v2323 = vpop.f32.mrf.mxu0
        %v2324 = vadd.f32 0.0, %v2323
        %2325 = vmatmul.f32.gmra.mxu0 %v2274
        %v2326 = vpop.f32.mrf.mxu0
        %2327 = vmatmul.f32.gmra.mxu0 %v2276
        %v2328 = vpop.f32.mrf.mxu0
        %2329 = vmatmul.f32.gmra.mxu0 %v2278
        %v2330 = vpop.f32.mrf.mxu0
        %2331 = vdwg.mxu0
        %2332 = vmatpush.msra.mxu0 0.0
        %2333 = vmatpush.msra.mxu0 0.0
        %2334 = vmatpush.msra.mxu0 0.0
        %2335 = vmatpush.msra.mxu0 0.0
        %2336 = vmatpush.msra.mxu0 0.0
        %2337 = vmatpush.msra.mxu0 0.0
        %2338 = vmatpush.msra.mxu0 0.0
        %2339 = vmatpush.msra.mxu0 0.0
        %2340 = vmatpush.msra.mxu0 0.0
        %2341 = vmatpush.msra.mxu0 0.0
        %2342 = vmatpush.msra.mxu0 0.0
        %2343 = vmatpush.msra.mxu0 0.0
        %2344 = vmatpush.msra.mxu0 %v2250
        %2345 = vmatpush.msra.mxu0 %v2244
        %2346 = vmatpush.msra.mxu0 %v2238
        %2347 = vmatpush.msra.mxu0 %v2232
        %2348 = vmatmul.f32.gmra.mxu0 %v2272
        %v2349 = vpop.f32.mrf.mxu0
        %v2350 = vadd.f32 0.0, %v2349
        %2351 = vmatmul.f32.gmra.mxu0 %v2274
        %v2352 = vpop.f32.mrf.mxu0
        %2353 = vmatmul.f32.gmra.mxu0 %v2276
        %v2354 = vpop.f32.mrf.mxu0
        %2355 = vmatmul.f32.gmra.mxu0 %v2278
        %v2356 = vpop.f32.mrf.mxu0
        %2357 = vdwg.mxu0
        %v2358 = vadd.f32 %v2216, %v2298
        %v2359 = vadd.f32 %v2217, %v2324
        %v2360 = vadd.f32 %v2218, %v2350
        %2361 = vrot.lane.b32.xlu0 %v1823, 109
        %v2362 = vpop.permute.xlu0 %2361
        %2363 = vrot.lane.b32.xlu0 %v1824, 109
        %v2364 = vpop.permute.xlu0 %2363
        %2365 = vrot.lane.b32.xlu0 %v1825, 109
        %v2366 = vpop.permute.xlu0 %2365
        %2367 = vrot.lane.b32.xlu0 %v1826, 109
        %v2368 = vpop.permute.xlu0 %2367
        %2369 = vrot.lane.b32.xlu0 %v1827, 109
        %v2370 = vpop.permute.xlu0 %2369
        %2371 = vrot.lane.b32.xlu0 %v1828, 109
        %v2372 = vpop.permute.xlu0 %2371
        %2373 = vrot.lane.b32.xlu0 %v1829, 109
        %v2374 = vpop.permute.xlu0 %2373
        %2375 = vrot.lane.b32.xlu0 %v1830, 109
        %v2376 = vpop.permute.xlu0 %2375
        %2377 = vrot.lane.b32.xlu0 %v1831, 109
        %v2378 = vpop.permute.xlu0 %2377
        %2379 = vrot.lane.b32.xlu0 %v1832, 109
        %v2380 = vpop.permute.xlu0 %2379
        %2381 = vrot.lane.b32.xlu0 %v1833, 109
        %v2382 = vpop.permute.xlu0 %2381
        %2383 = vrot.lane.b32.xlu0 %v1834, 109
        %v2384 = vpop.permute.xlu0 %2383
        %vm2385 = vcmask 891904
        %v2386 = vsel %vm2385, %v2362, %v2364
        %v2387 = vsel %vm2385, %v2364, %v2366
        %v2388 = vsel %vm2385, %v2368, %v2370
        %v2389 = vsel %vm2385, %v2370, %v2372
        %v2390 = vsel %vm2385, %v2374, %v2376
        %v2391 = vsel %vm2385, %v2376, %v2378
        %v2392 = vsel %vm2385, %v2380, %v2382
        %v2393 = vsel %vm2385, %v2382, %v2384
        %v2407 = vsel %vm1904, %v1812, 0
        %v2410 = vsel %vm1904, %v1815, 0
        %v2413 = vsel %vm1904, %v1818, 0
        %v2416 = vsel %vm1904, %v1821, 0
        %2418 = vmatpush.msra.mxu0 0.0
        %2419 = vmatpush.msra.mxu0 0.0
        %2420 = vmatpush.msra.mxu0 0.0
        %2421 = vmatpush.msra.mxu0 0.0
        %2422 = vmatpush.msra.mxu0 0.0
        %2423 = vmatpush.msra.mxu0 0.0
        %2424 = vmatpush.msra.mxu0 0.0
        %2425 = vmatpush.msra.mxu0 0.0
        %2426 = vmatpush.msra.mxu0 0.0
        %2427 = vmatpush.msra.mxu0 0.0
        %2428 = vmatpush.msra.mxu0 0.0
        %2429 = vmatpush.msra.mxu0 0.0
        %2430 = vmatpush.msra.mxu0 %v2392
        %2431 = vmatpush.msra.mxu0 %v2390
        %2432 = vmatpush.msra.mxu0 %v2388
        %2433 = vmatpush.msra.mxu0 %v2386
        %2434 = vmatmul.f32.gmra.mxu0 %v2407
        %v2435 = vpop.f32.mrf.mxu0
        %v2436 = vadd.f32 0.0, %v2435
        %2437 = vmatmul.f32.gmra.mxu0 %v2410
        %v2438 = vpop.f32.mrf.mxu0
        %2439 = vmatmul.f32.gmra.mxu0 %v2413
        %v2440 = vpop.f32.mrf.mxu0
        %2441 = vmatmul.f32.gmra.mxu0 %v2416
        %v2442 = vpop.f32.mrf.mxu0
        %2443 = vdwg.mxu0
        %2444 = vmatpush.msra.mxu0 0.0
        %2445 = vmatpush.msra.mxu0 0.0
        %2446 = vmatpush.msra.mxu0 0.0
        %2447 = vmatpush.msra.mxu0 0.0
        %2448 = vmatpush.msra.mxu0 0.0
        %2449 = vmatpush.msra.mxu0 0.0
        %2450 = vmatpush.msra.mxu0 0.0
        %2451 = vmatpush.msra.mxu0 0.0
        %2452 = vmatpush.msra.mxu0 0.0
        %2453 = vmatpush.msra.mxu0 0.0
        %2454 = vmatpush.msra.mxu0 0.0
        %2455 = vmatpush.msra.mxu0 0.0
        %2456 = vmatpush.msra.mxu0 %v2393
        %2457 = vmatpush.msra.mxu0 %v2391
        %2458 = vmatpush.msra.mxu0 %v2389
        %2459 = vmatpush.msra.mxu0 %v2387
        %2460 = vmatmul.f32.gmra.mxu0 %v2407
        %v2461 = vpop.f32.mrf.mxu0
        %v2462 = vadd.f32 0.0, %v2461
        %2463 = vmatmul.f32.gmra.mxu0 %v2410
        %v2464 = vpop.f32.mrf.mxu0
        %2465 = vmatmul.f32.gmra.mxu0 %v2413
        %v2466 = vpop.f32.mrf.mxu0
        %2467 = vmatmul.f32.gmra.mxu0 %v2416
        %v2468 = vpop.f32.mrf.mxu0
        %2469 = vdwg.mxu0
        %2470 = vmatpush.msra.mxu0 0.0
        %2471 = vmatpush.msra.mxu0 0.0
        %2472 = vmatpush.msra.mxu0 0.0
        %2473 = vmatpush.msra.mxu0 0.0
        %2474 = vmatpush.msra.mxu0 0.0
        %2475 = vmatpush.msra.mxu0 0.0
        %2476 = vmatpush.msra.mxu0 0.0
        %2477 = vmatpush.msra.mxu0 0.0
        %2478 = vmatpush.msra.mxu0 0.0
        %2479 = vmatpush.msra.mxu0 0.0
        %2480 = vmatpush.msra.mxu0 0.0
        %2481 = vmatpush.msra.mxu0 0.0
        %2482 = vmatpush.msra.mxu0 %v2384
        %2483 = vmatpush.msra.mxu0 %v2378
        %2484 = vmatpush.msra.mxu0 %v2372
        %2485 = vmatpush.msra.mxu0 %v2366
        %2486 = vmatmul.f32.gmra.mxu0 %v2407
        %v2487 = vpop.f32.mrf.mxu0
        %v2488 = vadd.f32 0.0, %v2487
        %2489 = vmatmul.f32.gmra.mxu0 %v2410
        %v2490 = vpop.f32.mrf.mxu0
        %2491 = vmatmul.f32.gmra.mxu0 %v2413
        %v2492 = vpop.f32.mrf.mxu0
        %2493 = vmatmul.f32.gmra.mxu0 %v2416
        %v2494 = vpop.f32.mrf.mxu0
        %2495 = vdwg.mxu0
        %v2496 = vadd.f32 %v2358, %v2436
        %v2497 = vadd.f32 %v2359, %v2462
        %v2498 = vadd.f32 %v2360, %v2488
        %2499 = vrot.lane.b32.xlu0 %v1812, 96
        %v2500 = vpop.permute.xlu0 %2499
        %2501 = vrot.lane.b32.xlu0 %v1815, 96
        %v2502 = vpop.permute.xlu0 %2501
        %2503 = vrot.lane.b32.xlu0 %v1818, 96
        %v2504 = vpop.permute.xlu0 %2503
        %2505 = vrot.lane.b32.xlu0 %v1821, 96
        %v2506 = vpop.permute.xlu0 %2505
        %2507 = vrot.lane.b32.xlu0 %v1823, 108
        %v2508 = vpop.permute.xlu0 %2507
        %2509 = vrot.lane.b32.xlu0 %v1824, 108
        %v2510 = vpop.permute.xlu0 %2509
        %2511 = vrot.lane.b32.xlu0 %v1825, 108
        %v2512 = vpop.permute.xlu0 %2511
        %2513 = vrot.lane.b32.xlu0 %v1826, 108
        %v2514 = vpop.permute.xlu0 %2513
        %2515 = vrot.lane.b32.xlu0 %v1827, 108
        %v2516 = vpop.permute.xlu0 %2515
        %2517 = vrot.lane.b32.xlu0 %v1828, 108
        %v2518 = vpop.permute.xlu0 %2517
        %2519 = vrot.lane.b32.xlu0 %v1829, 108
        %v2520 = vpop.permute.xlu0 %2519
        %2521 = vrot.lane.b32.xlu0 %v1830, 108
        %v2522 = vpop.permute.xlu0 %2521
        %2523 = vrot.lane.b32.xlu0 %v1831, 108
        %v2524 = vpop.permute.xlu0 %2523
        %2525 = vrot.lane.b32.xlu0 %v1832, 108
        %v2526 = vpop.permute.xlu0 %2525
        %2527 = vrot.lane.b32.xlu0 %v1833, 108
        %v2528 = vpop.permute.xlu0 %2527
        %2529 = vrot.lane.b32.xlu0 %v1834, 108
        %v2530 = vpop.permute.xlu0 %2529
        %vm2531 = vcmask 883712
        %v2532 = vsel %vm2531, %v2508, %v2510
        %v2533 = vsel %vm2531, %v2510, %v2512
        %v2534 = vsel %vm2531, %v2514, %v2516
        %v2535 = vsel %vm2531, %v2516, %v2518
        %v2536 = vsel %vm2531, %v2520, %v2522
        %v2537 = vsel %vm2531, %v2522, %v2524
        %v2538 = vsel %vm2531, %v2526, %v2528
        %v2539 = vsel %vm2531, %v2528, %v2530
        %v2552 = vsel %vm1904, %v2500, 0
        %v2554 = vsel %vm1904, %v2502, 0
        %v2556 = vsel %vm1904, %v2504, 0
        %v2558 = vsel %vm1904, %v2506, 0
        %2560 = vmatpush.msra.mxu0 0.0
        %2561 = vmatpush.msra.mxu0 0.0
        %2562 = vmatpush.msra.mxu0 0.0
        %2563 = vmatpush.msra.mxu0 0.0
        %2564 = vmatpush.msra.mxu0 0.0
        %2565 = vmatpush.msra.mxu0 0.0
        %2566 = vmatpush.msra.mxu0 0.0
        %2567 = vmatpush.msra.mxu0 0.0
        %2568 = vmatpush.msra.mxu0 0.0
        %2569 = vmatpush.msra.mxu0 0.0
        %2570 = vmatpush.msra.mxu0 0.0
        %2571 = vmatpush.msra.mxu0 0.0
        %2572 = vmatpush.msra.mxu0 %v2538
        %2573 = vmatpush.msra.mxu0 %v2536
        %2574 = vmatpush.msra.mxu0 %v2534
        %2575 = vmatpush.msra.mxu0 %v2532
        %2576 = vmatmul.f32.gmra.mxu0 %v2552
        %v2577 = vpop.f32.mrf.mxu0
        %v2578 = vadd.f32 0.0, %v2577
        %2579 = vmatmul.f32.gmra.mxu0 %v2554
        %v2580 = vpop.f32.mrf.mxu0
        %2581 = vmatmul.f32.gmra.mxu0 %v2556
        %v2582 = vpop.f32.mrf.mxu0
        %2583 = vmatmul.f32.gmra.mxu0 %v2558
        %v2584 = vpop.f32.mrf.mxu0
        %2585 = vdwg.mxu0
        %2586 = vmatpush.msra.mxu0 0.0
        %2587 = vmatpush.msra.mxu0 0.0
        %2588 = vmatpush.msra.mxu0 0.0
        %2589 = vmatpush.msra.mxu0 0.0
        %2590 = vmatpush.msra.mxu0 0.0
        %2591 = vmatpush.msra.mxu0 0.0
        %2592 = vmatpush.msra.mxu0 0.0
        %2593 = vmatpush.msra.mxu0 0.0
        %2594 = vmatpush.msra.mxu0 0.0
        %2595 = vmatpush.msra.mxu0 0.0
        %2596 = vmatpush.msra.mxu0 0.0
        %2597 = vmatpush.msra.mxu0 0.0
        %2598 = vmatpush.msra.mxu0 %v2539
        %2599 = vmatpush.msra.mxu0 %v2537
        %2600 = vmatpush.msra.mxu0 %v2535
        %2601 = vmatpush.msra.mxu0 %v2533
        %2602 = vmatmul.f32.gmra.mxu0 %v2552
        %v2603 = vpop.f32.mrf.mxu0
        %v2604 = vadd.f32 0.0, %v2603
        %2605 = vmatmul.f32.gmra.mxu0 %v2554
        %v2606 = vpop.f32.mrf.mxu0
        %2607 = vmatmul.f32.gmra.mxu0 %v2556
        %v2608 = vpop.f32.mrf.mxu0
        %2609 = vmatmul.f32.gmra.mxu0 %v2558
        %v2610 = vpop.f32.mrf.mxu0
        %2611 = vdwg.mxu0
        %2612 = vmatpush.msra.mxu0 0.0
        %2613 = vmatpush.msra.mxu0 0.0
        %2614 = vmatpush.msra.mxu0 0.0
        %2615 = vmatpush.msra.mxu0 0.0
        %2616 = vmatpush.msra.mxu0 0.0
        %2617 = vmatpush.msra.mxu0 0.0
        %2618 = vmatpush.msra.mxu0 0.0
        %2619 = vmatpush.msra.mxu0 0.0
        %2620 = vmatpush.msra.mxu0 0.0
        %2621 = vmatpush.msra.mxu0 0.0
        %2622 = vmatpush.msra.mxu0 0.0
        %2623 = vmatpush.msra.mxu0 0.0
        %2624 = vmatpush.msra.mxu0 %v2530
        %2625 = vmatpush.msra.mxu0 %v2524
        %2626 = vmatpush.msra.mxu0 %v2518
        %2627 = vmatpush.msra.mxu0 %v2512
        %2628 = vmatmul.f32.gmra.mxu0 %v2552
        %v2629 = vpop.f32.mrf.mxu0
        %v2630 = vadd.f32 0.0, %v2629
        %2631 = vmatmul.f32.gmra.mxu0 %v2554
        %v2632 = vpop.f32.mrf.mxu0
        %2633 = vmatmul.f32.gmra.mxu0 %v2556
        %v2634 = vpop.f32.mrf.mxu0
        %2635 = vmatmul.f32.gmra.mxu0 %v2558
        %v2636 = vpop.f32.mrf.mxu0
        %2637 = vdwg.mxu0
        %v2638 = vadd.f32 %v2496, %v2578
        %v2639 = vadd.f32 %v2497, %v2604
        %v2640 = vadd.f32 %v2498, %v2630
        %2641 = vrot.lane.b32.xlu0 %v1812, 64
        %v2642 = vpop.permute.xlu0 %2641
        %2643 = vrot.lane.b32.xlu0 %v1815, 64
        %v2644 = vpop.permute.xlu0 %2643
        %2645 = vrot.lane.b32.xlu0 %v1818, 64
        %v2646 = vpop.permute.xlu0 %2645
        %2647 = vrot.lane.b32.xlu0 %v1821, 64
        %v2648 = vpop.permute.xlu0 %2647
        %2649 = vrot.lane.b32.xlu0 %v1823, 92
        %v2650 = vpop.permute.xlu0 %2649
        %2651 = vrot.lane.b32.xlu0 %v1824, 92
        %v2652 = vpop.permute.xlu0 %2651
        %2653 = vrot.lane.b32.xlu0 %v1825, 92
        %v2654 = vpop.permute.xlu0 %2653
        %2655 = vrot.lane.b32.xlu0 %v1826, 92
        %v2656 = vpop.permute.xlu0 %2655
        %2657 = vrot.lane.b32.xlu0 %v1827, 92
        %v2658 = vpop.permute.xlu0 %2657
        %2659 = vrot.lane.b32.xlu0 %v1828, 92
        %v2660 = vpop.permute.xlu0 %2659
        %2661 = vrot.lane.b32.xlu0 %v1829, 92
        %v2662 = vpop.permute.xlu0 %2661
        %2663 = vrot.lane.b32.xlu0 %v1830, 92
        %v2664 = vpop.permute.xlu0 %2663
        %2665 = vrot.lane.b32.xlu0 %v1831, 92
        %v2666 = vpop.permute.xlu0 %2665
        %2667 = vrot.lane.b32.xlu0 %v1832, 92
        %v2668 = vpop.permute.xlu0 %2667
        %2669 = vrot.lane.b32.xlu0 %v1833, 92
        %v2670 = vpop.permute.xlu0 %2669
        %2671 = vrot.lane.b32.xlu0 %v1834, 92
        %v2672 = vpop.permute.xlu0 %2671
        %vm2673 = vcmask 752640
        %v2674 = vsel %vm2673, %v2650, %v2652
        %v2675 = vsel %vm2673, %v2652, %v2654
        %v2676 = vsel %vm2673, %v2656, %v2658
        %v2677 = vsel %vm2673, %v2658, %v2660
        %v2678 = vsel %vm2673, %v2662, %v2664
        %v2679 = vsel %vm2673, %v2664, %v2666
        %v2680 = vsel %vm2673, %v2668, %v2670
        %v2681 = vsel %vm2673, %v2670, %v2672
        %v2694 = vsel %vm1904, %v2642, 0
        %v2696 = vsel %vm1904, %v2644, 0
        %v2698 = vsel %vm1904, %v2646, 0
        %v2700 = vsel %vm1904, %v2648, 0
        %2702 = vmatpush.msra.mxu0 0.0
        %2703 = vmatpush.msra.mxu0 0.0
        %2704 = vmatpush.msra.mxu0 0.0
        %2705 = vmatpush.msra.mxu0 0.0
        %2706 = vmatpush.msra.mxu0 0.0
        %2707 = vmatpush.msra.mxu0 0.0
        %2708 = vmatpush.msra.mxu0 0.0
        %2709 = vmatpush.msra.mxu0 0.0
        %2710 = vmatpush.msra.mxu0 0.0
        %2711 = vmatpush.msra.mxu0 0.0
        %2712 = vmatpush.msra.mxu0 0.0
        %2713 = vmatpush.msra.mxu0 0.0
        %2714 = vmatpush.msra.mxu0 %v2680
        %2715 = vmatpush.msra.mxu0 %v2678
        %2716 = vmatpush.msra.mxu0 %v2676
        %2717 = vmatpush.msra.mxu0 %v2674
        %2718 = vmatmul.f32.gmra.mxu0 %v2694
        %v2719 = vpop.f32.mrf.mxu0
        %v2720 = vadd.f32 0.0, %v2719
        %2721 = vmatmul.f32.gmra.mxu0 %v2696
        %v2722 = vpop.f32.mrf.mxu0
        %2723 = vmatmul.f32.gmra.mxu0 %v2698
        %v2724 = vpop.f32.mrf.mxu0
        %2725 = vmatmul.f32.gmra.mxu0 %v2700
        %v2726 = vpop.f32.mrf.mxu0
        %2727 = vdwg.mxu0
        %2728 = vmatpush.msra.mxu0 0.0
        %2729 = vmatpush.msra.mxu0 0.0
        %2730 = vmatpush.msra.mxu0 0.0
        %2731 = vmatpush.msra.mxu0 0.0
        %2732 = vmatpush.msra.mxu0 0.0
        %2733 = vmatpush.msra.mxu0 0.0
        %2734 = vmatpush.msra.mxu0 0.0
        %2735 = vmatpush.msra.mxu0 0.0
        %2736 = vmatpush.msra.mxu0 0.0
        %2737 = vmatpush.msra.mxu0 0.0
        %2738 = vmatpush.msra.mxu0 0.0
        %2739 = vmatpush.msra.mxu0 0.0
        %2740 = vmatpush.msra.mxu0 %v2681
        %2741 = vmatpush.msra.mxu0 %v2679
        %2742 = vmatpush.msra.mxu0 %v2677
        %2743 = vmatpush.msra.mxu0 %v2675
        %2744 = vmatmul.f32.gmra.mxu0 %v2694
        %v2745 = vpop.f32.mrf.mxu0
        %v2746 = vadd.f32 0.0, %v2745
        %2747 = vmatmul.f32.gmra.mxu0 %v2696
        %v2748 = vpop.f32.mrf.mxu0
        %2749 = vmatmul.f32.gmra.mxu0 %v2698
        %v2750 = vpop.f32.mrf.mxu0
        %2751 = vmatmul.f32.gmra.mxu0 %v2700
        %v2752 = vpop.f32.mrf.mxu0
        %2753 = vdwg.mxu0
        %2754 = vmatpush.msra.mxu0 0.0
        %2755 = vmatpush.msra.mxu0 0.0
        %2756 = vmatpush.msra.mxu0 0.0
        %2757 = vmatpush.msra.mxu0 0.0
        %2758 = vmatpush.msra.mxu0 0.0
        %2759 = vmatpush.msra.mxu0 0.0
        %2760 = vmatpush.msra.mxu0 0.0
        %2761 = vmatpush.msra.mxu0 0.0
        %2762 = vmatpush.msra.mxu0 0.0
        %2763 = vmatpush.msra.mxu0 0.0
        %2764 = vmatpush.msra.mxu0 0.0
        %2765 = vmatpush.msra.mxu0 0.0
        %2766 = vmatpush.msra.mxu0 %v2672
        %2767 = vmatpush.msra.mxu0 %v2666
        %2768 = vmatpush.msra.mxu0 %v2660
        %2769 = vmatpush.msra.mxu0 %v2654
        %2770 = vmatmul.f32.gmra.mxu0 %v2694
        %v2771 = vpop.f32.mrf.mxu0
        %v2772 = vadd.f32 0.0, %v2771
        %2773 = vmatmul.f32.gmra.mxu0 %v2696
        %v2774 = vpop.f32.mrf.mxu0
        %2775 = vmatmul.f32.gmra.mxu0 %v2698
        %v2776 = vpop.f32.mrf.mxu0
        %2777 = vmatmul.f32.gmra.mxu0 %v2700
        %v2778 = vpop.f32.mrf.mxu0
        %2779 = vdwg.mxu0
        %v2780 = vadd.f32 %v2638, %v2720
        %v2781 = vadd.f32 %v2639, %v2746
        %v2782 = vadd.f32 %v2640, %v2772
        %2783 = vrot.lane.b32.xlu0 %v1812, 32
        %v2784 = vpop.permute.xlu0 %2783
        %2785 = vrot.lane.b32.xlu0 %v1815, 32
        %v2786 = vpop.permute.xlu0 %2785
        %2787 = vrot.lane.b32.xlu0 %v1818, 32
        %v2788 = vpop.permute.xlu0 %2787
        %2789 = vrot.lane.b32.xlu0 %v1821, 32
        %v2790 = vpop.permute.xlu0 %2789
        %2791 = vrot.lane.b32.xlu0 %v1823, 91
        %v2792 = vpop.permute.xlu0 %2791
        %2793 = vrot.lane.b32.xlu0 %v1824, 91
        %v2794 = vpop.permute.xlu0 %2793
        %2795 = vrot.lane.b32.xlu0 %v1825, 91
        %v2796 = vpop.permute.xlu0 %2795
        %2797 = vrot.lane.b32.xlu0 %v1826, 91
        %v2798 = vpop.permute.xlu0 %2797
        %2799 = vrot.lane.b32.xlu0 %v1827, 91
        %v2800 = vpop.permute.xlu0 %2799
        %2801 = vrot.lane.b32.xlu0 %v1828, 91
        %v2802 = vpop.permute.xlu0 %2801
        %2803 = vrot.lane.b32.xlu0 %v1829, 91
        %v2804 = vpop.permute.xlu0 %2803
        %2805 = vrot.lane.b32.xlu0 %v1830, 91
        %v2806 = vpop.permute.xlu0 %2805
        %2807 = vrot.lane.b32.xlu0 %v1831, 91
        %v2808 = vpop.permute.xlu0 %2807
        %2809 = vrot.lane.b32.xlu0 %v1832, 91
        %v2810 = vpop.permute.xlu0 %2809
        %2811 = vrot.lane.b32.xlu0 %v1833, 91
        %v2812 = vpop.permute.xlu0 %2811
        %2813 = vrot.lane.b32.xlu0 %v1834, 91
        %v2814 = vpop.permute.xlu0 %2813
        %vm2815 = vcmask 744448
        %v2816 = vsel %vm2815, %v2792, %v2794
        %v2817 = vsel %vm2815, %v2794, %v2796
        %v2818 = vsel %vm2815, %v2798, %v2800
        %v2819 = vsel %vm2815, %v2800, %v2802
        %v2820 = vsel %vm2815, %v2804, %v2806
        %v2821 = vsel %vm2815, %v2806, %v2808
        %v2822 = vsel %vm2815, %v2810, %v2812
        %v2823 = vsel %vm2815, %v2812, %v2814
        %v2836 = vsel %vm1904, %v2784, 0
        %v2838 = vsel %vm1904, %v2786, 0
        %v2840 = vsel %vm1904, %v2788, 0
        %v2842 = vsel %vm1904, %v2790, 0
        %2844 = vmatpush.msra.mxu0 0.0
        %2845 = vmatpush.msra.mxu0 0.0
        %2846 = vmatpush.msra.mxu0 0.0
        %2847 = vmatpush.msra.mxu0 0.0
        %2848 = vmatpush.msra.mxu0 0.0
        %2849 = vmatpush.msra.mxu0 0.0
        %2850 = vmatpush.msra.mxu0 0.0
        %2851 = vmatpush.msra.mxu0 0.0
        %2852 = vmatpush.msra.mxu0 0.0
        %2853 = vmatpush.msra.mxu0 0.0
        %2854 = vmatpush.msra.mxu0 0.0
        %2855 = vmatpush.msra.mxu0 0.0
        %2856 = vmatpush.msra.mxu0 %v2822
        %2857 = vmatpush.msra.mxu0 %v2820
        %2858 = vmatpush.msra.mxu0 %v2818
        %2859 = vmatpush.msra.mxu0 %v2816
        %2860 = vmatmul.f32.gmra.mxu0 %v2836
        %v2861 = vpop.f32.mrf.mxu0
        %v2862 = vadd.f32 0.0, %v2861
        %2863 = vmatmul.f32.gmra.mxu0 %v2838
        %v2864 = vpop.f32.mrf.mxu0
        %2865 = vmatmul.f32.gmra.mxu0 %v2840
        %v2866 = vpop.f32.mrf.mxu0
        %2867 = vmatmul.f32.gmra.mxu0 %v2842
        %v2868 = vpop.f32.mrf.mxu0
        %2869 = vdwg.mxu0
        %2870 = vmatpush.msra.mxu0 0.0
        %2871 = vmatpush.msra.mxu0 0.0
        %2872 = vmatpush.msra.mxu0 0.0
        %2873 = vmatpush.msra.mxu0 0.0
        %2874 = vmatpush.msra.mxu0 0.0
        %2875 = vmatpush.msra.mxu0 0.0
        %2876 = vmatpush.msra.mxu0 0.0
        %2877 = vmatpush.msra.mxu0 0.0
        %2878 = vmatpush.msra.mxu0 0.0
        %2879 = vmatpush.msra.mxu0 0.0
        %2880 = vmatpush.msra.mxu0 0.0
        %2881 = vmatpush.msra.mxu0 0.0
        %2882 = vmatpush.msra.mxu0 %v2823
        %2883 = vmatpush.msra.mxu0 %v2821
        %2884 = vmatpush.msra.mxu0 %v2819
        %2885 = vmatpush.msra.mxu0 %v2817
        %2886 = vmatmul.f32.gmra.mxu0 %v2836
        %v2887 = vpop.f32.mrf.mxu0
        %v2888 = vadd.f32 0.0, %v2887
        %2889 = vmatmul.f32.gmra.mxu0 %v2838
        %v2890 = vpop.f32.mrf.mxu0
        %2891 = vmatmul.f32.gmra.mxu0 %v2840
        %v2892 = vpop.f32.mrf.mxu0
        %2893 = vmatmul.f32.gmra.mxu0 %v2842
        %v2894 = vpop.f32.mrf.mxu0
        %2895 = vdwg.mxu0
        %2896 = vmatpush.msra.mxu0 0.0
        %2897 = vmatpush.msra.mxu0 0.0
        %2898 = vmatpush.msra.mxu0 0.0
        %2899 = vmatpush.msra.mxu0 0.0
        %2900 = vmatpush.msra.mxu0 0.0
        %2901 = vmatpush.msra.mxu0 0.0
        %2902 = vmatpush.msra.mxu0 0.0
        %2903 = vmatpush.msra.mxu0 0.0
        %2904 = vmatpush.msra.mxu0 0.0
        %2905 = vmatpush.msra.mxu0 0.0
        %2906 = vmatpush.msra.mxu0 0.0
        %2907 = vmatpush.msra.mxu0 0.0
        %2908 = vmatpush.msra.mxu0 %v2814
        %2909 = vmatpush.msra.mxu0 %v2808
        %2910 = vmatpush.msra.mxu0 %v2802
        %2911 = vmatpush.msra.mxu0 %v2796
        %2912 = vmatmul.f32.gmra.mxu0 %v2836
        %v2913 = vpop.f32.mrf.mxu0
        %v2914 = vadd.f32 0.0, %v2913
        %2915 = vmatmul.f32.gmra.mxu0 %v2838
        %v2916 = vpop.f32.mrf.mxu0
        %2917 = vmatmul.f32.gmra.mxu0 %v2840
        %v2918 = vpop.f32.mrf.mxu0
        %2919 = vmatmul.f32.gmra.mxu0 %v2842
        %v2920 = vpop.f32.mrf.mxu0
        %2921 = vdwg.mxu0
        %v2922 = vadd.f32 %v2780, %v2862
        %v2923 = vadd.f32 %v2781, %v2888
        %v2924 = vadd.f32 %v2782, %v2914
        %2925 = vrot.lane.b32.xlu0 %v1823, 90
        %v2926 = vpop.permute.xlu0 %2925
        %2927 = vrot.lane.b32.xlu0 %v1824, 90
        %v2928 = vpop.permute.xlu0 %2927
        %2929 = vrot.lane.b32.xlu0 %v1825, 90
        %v2930 = vpop.permute.xlu0 %2929
        %2931 = vrot.lane.b32.xlu0 %v1826, 90
        %v2932 = vpop.permute.xlu0 %2931
        %2933 = vrot.lane.b32.xlu0 %v1827, 90
        %v2934 = vpop.permute.xlu0 %2933
        %2935 = vrot.lane.b32.xlu0 %v1828, 90
        %v2936 = vpop.permute.xlu0 %2935
        %2937 = vrot.lane.b32.xlu0 %v1829, 90
        %v2938 = vpop.permute.xlu0 %2937
        %2939 = vrot.lane.b32.xlu0 %v1830, 90
        %v2940 = vpop.permute.xlu0 %2939
        %2941 = vrot.lane.b32.xlu0 %v1831, 90
        %v2942 = vpop.permute.xlu0 %2941
        %2943 = vrot.lane.b32.xlu0 %v1832, 90
        %v2944 = vpop.permute.xlu0 %2943
        %2945 = vrot.lane.b32.xlu0 %v1833, 90
        %v2946 = vpop.permute.xlu0 %2945
        %2947 = vrot.lane.b32.xlu0 %v1834, 90
        %v2948 = vpop.permute.xlu0 %2947
        %vm2949 = vcmask 736256
        %v2950 = vsel %vm2949, %v2926, %v2928
        %v2951 = vsel %vm2949, %v2928, %v2930
        %v2952 = vsel %vm2949, %v2932, %v2934
        %v2953 = vsel %vm2949, %v2934, %v2936
        %v2954 = vsel %vm2949, %v2938, %v2940
        %v2955 = vsel %vm2949, %v2940, %v2942
        %v2956 = vsel %vm2949, %v2944, %v2946
        %v2957 = vsel %vm2949, %v2946, %v2948
        %v2971 = vsel %vm1904, %v1813, 0
        %v2974 = vsel %vm1904, %v1816, 0
        %v2977 = vsel %vm1904, %v1819, 0
        %v2980 = vsel %vm1904, %v1822, 0
        %2982 = vmatpush.msra.mxu0 0.0
        %2983 = vmatpush.msra.mxu0 0.0
        %2984 = vmatpush.msra.mxu0 0.0
        %2985 = vmatpush.msra.mxu0 0.0
        %2986 = vmatpush.msra.mxu0 0.0
        %2987 = vmatpush.msra.mxu0 0.0
        %2988 = vmatpush.msra.mxu0 0.0
        %2989 = vmatpush.msra.mxu0 0.0
        %2990 = vmatpush.msra.mxu0 0.0
        %2991 = vmatpush.msra.mxu0 0.0
        %2992 = vmatpush.msra.mxu0 0.0
        %2993 = vmatpush.msra.mxu0 0.0
        %2994 = vmatpush.msra.mxu0 %v2956
        %2995 = vmatpush.msra.mxu0 %v2954
        %2996 = vmatpush.msra.mxu0 %v2952
        %2997 = vmatpush.msra.mxu0 %v2950
        %2998 = vmatmul.f32.gmra.mxu0 %v2971
        %v2999 = vpop.f32.mrf.mxu0
        %v3000 = vadd.f32 0.0, %v2999
        %3001 = vmatmul.f32.gmra.mxu0 %v2974
        %v3002 = vpop.f32.mrf.mxu0
        %3003 = vmatmul.f32.gmra.mxu0 %v2977
        %v3004 = vpop.f32.mrf.mxu0
        %3005 = vmatmul.f32.gmra.mxu0 %v2980
        %v3006 = vpop.f32.mrf.mxu0
        %3007 = vdwg.mxu0
        %3008 = vmatpush.msra.mxu0 0.0
        %3009 = vmatpush.msra.mxu0 0.0
        %3010 = vmatpush.msra.mxu0 0.0
        %3011 = vmatpush.msra.mxu0 0.0
        %3012 = vmatpush.msra.mxu0 0.0
        %3013 = vmatpush.msra.mxu0 0.0
        %3014 = vmatpush.msra.mxu0 0.0
        %3015 = vmatpush.msra.mxu0 0.0
        %3016 = vmatpush.msra.mxu0 0.0
        %3017 = vmatpush.msra.mxu0 0.0
        %3018 = vmatpush.msra.mxu0 0.0
        %3019 = vmatpush.msra.mxu0 0.0
        %3020 = vmatpush.msra.mxu0 %v2957
        %3021 = vmatpush.msra.mxu0 %v2955
        %3022 = vmatpush.msra.mxu0 %v2953
        %3023 = vmatpush.msra.mxu0 %v2951
        %3024 = vmatmul.f32.gmra.mxu0 %v2971
        %v3025 = vpop.f32.mrf.mxu0
        %v3026 = vadd.f32 0.0, %v3025
        %3027 = vmatmul.f32.gmra.mxu0 %v2974
        %v3028 = vpop.f32.mrf.mxu0
        %3029 = vmatmul.f32.gmra.mxu0 %v2977
        %v3030 = vpop.f32.mrf.mxu0
        %3031 = vmatmul.f32.gmra.mxu0 %v2980
        %v3032 = vpop.f32.mrf.mxu0
        %3033 = vdwg.mxu0
        %3034 = vmatpush.msra.mxu0 0.0
        %3035 = vmatpush.msra.mxu0 0.0
        %3036 = vmatpush.msra.mxu0 0.0
        %3037 = vmatpush.msra.mxu0 0.0
        %3038 = vmatpush.msra.mxu0 0.0
        %3039 = vmatpush.msra.mxu0 0.0
        %3040 = vmatpush.msra.mxu0 0.0
        %3041 = vmatpush.msra.mxu0 0.0
        %3042 = vmatpush.msra.mxu0 0.0
        %3043 = vmatpush.msra.mxu0 0.0
        %3044 = vmatpush.msra.mxu0 0.0
        %3045 = vmatpush.msra.mxu0 0.0
        %3046 = vmatpush.msra.mxu0 %v2948
        %3047 = vmatpush.msra.mxu0 %v2942
        %3048 = vmatpush.msra.mxu0 %v2936
        %3049 = vmatpush.msra.mxu0 %v2930
        %3050 = vmatmul.f32.gmra.mxu0 %v2971
        %v3051 = vpop.f32.mrf.mxu0
        %v3052 = vadd.f32 0.0, %v3051
        %3053 = vmatmul.f32.gmra.mxu0 %v2974
        %v3054 = vpop.f32.mrf.mxu0
        %3055 = vmatmul.f32.gmra.mxu0 %v2977
        %v3056 = vpop.f32.mrf.mxu0
        %3057 = vmatmul.f32.gmra.mxu0 %v2980
        %v3058 = vpop.f32.mrf.mxu0
        %3059 = vdwg.mxu0
        %v3060 = vadd.f32 %v2922, %v3000
        %v3061 = vadd.f32 %v2923, %v3026
        %v3062 = vadd.f32 %v2924, %v3052
        %s3063 = scalar_lea.vmem %s3, 160
        %v3064 = vld [vmem:[%s3063] sm:$0xff]
        %3066 = vset.pattern.permute.xlu0 0
        %3067 = vperm.xlu0 %3066, %v3064
        %v3068 = vpop.permute.xlu0 %3067
        %v3070 = vadd.f32 %v3060, %v3068
        %v3071 = vadd.f32 %v3061, %v3068
        %v3072 = vadd.f32 %v3062, %v3068
        %v3075 = vrot.slane %v3071, 4
        %vm3076 = vcmask 1043456
        %v3077 = vsel %vm3076, %v3070, %v3075
        %v3079 = vsub.f32 %v241, %v3077
        %v3080 = vsub.f32 %v242, %v3072
        %3081 = vst [vmem:[%s214] sm:$0xff] %v3079
        %vm3082 = vcmask 257024
        %3083 = vst.msk [vmem:[%s214 + $0x8] sm:$0xf] %vm3082, %v3080
        %p3084 = scmp.lt.s32.totalorder %s16, 1
        %s3085 = scalar_select %p3084, %s16, 1
        %s3086 = smul.addr %s3085, 3
        %s3087 = smul.addr %s3086, 4
        %s3088 = scalar_lea.vmem %s4, %s3087
        // Predicated region
        $region48: #{dncnn_forward_pallas.1} parent=35 // pred_check
          %p3089 = pneg %p123
        $region49: #{dncnn_forward_pallas.1} parent=35 // pred_check_branch
          %3091 = sbr.rel (%p3089) target = $region51
        $region50: #{dncnn_forward_pallas.1} parent=35 // pred_region
          _
        $region51: #{dncnn_forward_pallas.1} parent=35 // pred_fallthru
          _
      $region36: #{dncnn_forward_pallas.1} parent=5 // pred_fallthru
        _
      %p3092 = scmp.le.s32.totalorder 2, %s11
      // Predicated region
      $region52: #{dncnn_forward_pallas.1} parent=5 // pred_check
        %p3093 = pneg %p3092
      $region53: #{dncnn_forward_pallas.1} parent=5 // pred_check_branch
        %3095 = sbr.rel (%p3093) target = $region55
      $region54: #{dncnn_forward_pallas.1} parent=5 // pred_region
        %s3096 = ssub.s32 %s11, 2
        // Predicated region
        $region56: #{dncnn_forward_pallas.1} parent=54 // pred_check
          %p3097 = pneg %p129
        $region57: #{dncnn_forward_pallas.1} parent=54 // pred_check_branch
          %3099 = sbr.rel (%p3097) target = $region59
        $region58: #{dncnn_forward_pallas.1} parent=54 // pred_region
          %p3100 = scmp.lt.s32.totalorder %s17, 1
          %s3101 = scalar_select %p3100, %s17, 1
          %s3102 = smul.addr %s3101, 3
          %s3103 = smul.addr %s3102, 4
          %s3104 = scalar_lea.vmem %s4, %s3103
        $region59: #{dncnn_forward_pallas.1} parent=54 // pred_fallthru
          _
      $region55: #{dncnn_forward_pallas.1} parent=5 // pred_fallthru
        _
    $region6: #{dncnn_forward_pallas.1} parent=1 // loop_footer
      %s15 = sadd.s32 1, %s11
    $region7: #{dncnn_forward_pallas.1} parent=1 // loop_footer_branch
      %10 = sbr.rel target = $region3
    $region8: #{dncnn_forward_pallas.1} parent=1 // loop_exit
      _
    %3105 = vsyncpa [#allocation4], 1
    %s3106 = scalar_lea.sflag [#allocation4], 1
    %3107 = vsyncpa %s3106, 1

</llo_original>
